<compile_context>
chip_gen: v7x
topology: tpu7x:2x2x1
jax: 0.10.0
libtpu: 0.0.40
codegen_flags: <defaults>
</compile_context>

<pallas_src>
from functools import partial

import jax
import jax.numpy as jnp
from jax.experimental import pallas as pl
from jax.experimental.pallas import tpu as pltpu


def _ru(v, m):
    return ((v + m - 1) // m) * m


def _tpu_vmem_bytes():
    try:
        return int(pltpu.get_tpu_info().vmem_capacity_bytes)
    except Exception:
        return 64 * (1 << 20)              # conservative (v7x-sized) fallback


_VMEM_BYTES = _tpu_vmem_bytes()
_BIG_VMEM = _VMEM_BYTES >= 100 * (1 << 20)   # v5e/v6e (128 MiB) vs v7x (64 MiB)
# v7x has 2 TensorCores (and the smaller VMEM): split the fc K-reduction across
# them.  On single-TC v5e/v6e the split only adds output traffic -> keep 1.
_FC_SPLIT_K = 1 if _BIG_VMEM else 2


# ----------------------------------------------------------------------------
# Pallas matmul kernels
# ----------------------------------------------------------------------------
def _apply_act(y, act):
    if act == "relu":
        return jnp.maximum(y, 0.0)
    if act == "sigmoid":
        return jax.nn.sigmoid(y)
    return y


def _mm1_kernel(x_ref, w_ref, b_ref, o_ref, *, act):
    """Single full-K shot: no accumulator scratch, dot + bias + act -> store."""
    y = jnp.dot(x_ref[...], w_ref[...], preferred_element_type=jnp.float32)
    y = _apply_act(y + b_ref[...], act)
    o_ref[...] = y.astype(o_ref.dtype)


def _mm_kernel(x_ref, w_ref, b_ref, o_ref, acc_ref, *, act, k_steps, k_axis):
    """Tiled matmul, bf16 operands, f32 VMEM accumulator, fused bias + act."""
    k = pl.program_id(k_axis)

    @pl.when(k == 0)
    def _():
        acc_ref[...] = jnp.zeros_like(acc_ref)

    acc_ref[...] += jnp.dot(x_ref[...], w_ref[...],
                            preferred_element_type=jnp.float32)

    @pl.when(k == k_steps - 1)
    def _():
        y = _apply_act(acc_ref[...] + b_ref[...], act)
        o_ref[...] = y.astype(o_ref.dtype)


def matmul_bias_act(x, w, b=None, act="none", *, bias_axis=1,
                    out_dtype=jnp.float32, split_k=1):
    """y = act(x @ w + b).   x:(M,K)  w:(K,N)  b:(N,) [bias_axis=1] or (M,).

    bf16 MXU operands, f32 accumulation.  bias_axis=0 is used by the
    channel-major conv formulation (bias per output row / channel).
    split_k > 1 shards the K reduction over a leading parallel grid axis
    (v7x, 2 TensorCores); partial sums + bias are combined outside.
    """
    M, K = x.shape
    Kw, N = w.shape
    assert Kw == K, (x.shape, w.shape)

    # ---- generation-aware VMEM caps -------------------------------------
    out_cap = (4 << 20) if _BIG_VMEM else (1 << 20)    # f32 acc / epilogue tile
    lhs_cap = (6 << 20) if _BIG_VMEM else (2 << 20)    # bf16 LHS tile
    rhs_cap = (4 << 20) if _BIG_VMEM else (1 << 20)    # bf16 RHS tile
    vmem_limit = (64 << 20) if _BIG_VMEM else (32 << 20)

    # ---- lane (N) tile: keep >=128 (unmasked stores) whenever possible ---
    if N < 128:
        tn = _ru(N, 8)
    else:
        tn = next(c for c in (8192, 4096, 2048, 1024, 512, 256, 128) if c <= N)
    # ---- sublane (M) tile -------------------------------------------------
    if M < 8:
        tm = 8
    else:
        tm = next(c for c in (4096, 2048, 1024, 512, 256, 128, 64, 32, 16, 8)
                  if c <= M)
    # Shrink to keep the f32 epilogue tile within cap; prefer shrinking tm so
    # the lane dim stays wide.
    while tm * tn * 4 > out_cap:
        if tm > 256 or tn <= 128:
            if tm <= 8:
                break
            tm //= 2
        else:
            tn //= 2
    Mp, Np = _ru(M, tm), _ru(N, tn)

    # ---- K tile: prefer one full-K shot (no accumulator scratch) ---------
    Kp = _ru(K, 8)
    if Kp * tm * 2 <= lhs_cap and Kp * tn * 2 <= rhs_cap:
        tk, k_tiles = Kp, 1
    else:
        Kp = _ru(K, 128)
        tk = 128
        for c in (8192, 4096, 2048, 1024, 512, 256):
            if Kp % c == 0 and c * tm * 2 <= lhs_cap and c * tn * 2 <= rhs_cap:
                tk = c
                break
        k_tiles = Kp // tk

    if (act != "none" or split_k < 2 or k_tiles % split_k != 0
            or out_dtype != jnp.float32):
        split_k = 1

    # ---- pad operands (almost always a no-op for this network) -----------
    xp = x.astype(jnp.bfloat16)
    if (Mp, Kp) != (M, K):
        xp = jnp.pad(xp, ((0, Mp - M), (0, Kp - K)))
    wp = w.astype(jnp.bfloat16)
    if (Kp, Np) != (K, N):
        wp = jnp.pad(wp, ((0, Kp - K), (0, Np - N)))

    add_bias_outside = split_k > 1
    if bias_axis == 1:
        bshape, bblk = (1, Np), (1, tn)
    else:
        bshape, bblk = (Mp, 1), (tm, 1)
    if b is None or add_bias_outside:
        bp = jnp.zeros(bshape, jnp.float32)
    else:
        tgt = Np if bias_axis == 1 else Mp
        bp = jnp.pad(b.astype(jnp.float32), (0, tgt - b.shape[0])).reshape(bshape)

    if split_k > 1:
        ks = k_tiles // split_k
        grid = (split_k, Mp // tm, Np // tn, ks)
        kernel = partial(_mm_kernel, act=act, k_steps=ks, k_axis=3)
        if bias_axis == 1:
            b_spec = pl.BlockSpec(bblk, lambda s, i, j, k: (0, j))
        else:
            b_spec = pl.BlockSpec(bblk, lambda s, i, j, k: (i, 0))
        in_specs = [
            pl.BlockSpec((tm, tk), lambda s, i, j, k: (i, s * ks + k)),
            pl.BlockSpec((tk, tn), lambda s, i, j, k: (s * ks + k, j)),
            b_spec,
        ]
        out_specs = pl.BlockSpec((None, tm, tn), lambda s, i, j, k: (s, i, j))
        out_shape = jax.ShapeDtypeStruct((split_k, Mp, Np), jnp.float32)
        scratch = [pltpu.VMEM((tm, tn), jnp.float32)]
        dims = ("parallel", "parallel", "parallel", "arbitrary")
    elif k_tiles > 1:
        grid = (Mp // tm, Np // tn, k_tiles)
        kernel = partial(_mm_kernel, act=act, k_steps=k_tiles, k_axis=2)
        if bias_axis == 1:
            b_spec = pl.BlockSpec(bblk, lambda i, j, k: (0, j))
        else:
            b_spec = pl.BlockSpec(bblk, lambda i, j, k: (i, 0))
        in_specs = [
            pl.BlockSpec((tm, tk), lambda i, j, k: (i, k)),
            pl.BlockSpec((tk, tn), lambda i, j, k: (k, j)),
            b_spec,
        ]
        out_specs = pl.BlockSpec((tm, tn), lambda i, j, k: (i, j))
        out_shape = jax.ShapeDtypeStruct((Mp, Np), out_dtype)
        scratch = [pltpu.VMEM((tm, tn), jnp.float32)]
        dims = ("parallel", "parallel", "arbitrary")
    else:
        grid = (Mp // tm, Np // tn)
        kernel = partial(_mm1_kernel, act=act)
        if bias_axis == 1:
            b_spec = pl.BlockSpec(bblk, lambda i, j: (0, j))
        else:
            b_spec = pl.BlockSpec(bblk, lambda i, j: (i, 0))
        in_specs = [
            pl.BlockSpec((tm, tk), lambda i, j: (i, 0)),
            pl.BlockSpec((tk, tn), lambda i, j: (0, j)),
            b_spec,
        ]
        out_specs = pl.BlockSpec((tm, tn), lambda i, j: (i, j))
        out_shape = jax.ShapeDtypeStruct((Mp, Np), out_dtype)
        scratch = []
        dims = ("parallel", "parallel")

    out = pl.pallas_call(
        kernel,
        out_shape=out_shape,
        grid_spec=pltpu.PrefetchScalarGridSpec(
            num_scalar_prefetch=0,
            grid=grid,
            in_specs=in_specs,
            out_specs=out_specs,
            scratch_shapes=scratch,
        ),
        compiler_params=pltpu.CompilerParams(
            dimension_semantics=dims,
            vmem_limit_bytes=vmem_limit),
    )(xp, wp, bp)

    if split_k > 1:
        out = out.sum(axis=0)
    out = out[:M, :N]
    if add_bias_outside and b is not None:
        if bias_axis == 1:
            out = out + b.astype(jnp.float32)[None, :]
        else:
            out = out + b.astype(jnp.float32)[:, None]
    return out


def _sumsq_kernel(w_ref, o_ref):
    o_ref[0] = jnp.sum(w_ref[...] * w_ref[...])


def sumsq_pallas(w):
    """sum(w ** 2) -> scalar float32 (Pallas reduction, run once at pack time)."""
    out = pl.pallas_call(
        _sumsq_kernel,
        out_shape=jax.ShapeDtypeStruct((1,), jnp.float32),
        in_specs=[pl.BlockSpec(memory_space=pltpu.MemorySpace.VMEM)],
        out_specs=pl.BlockSpec(memory_space=pltpu.MemorySpace.SMEM),
    )(w.astype(jnp.float32))
    return out[0]


# ----------------------------------------------------------------------------
# Conv layers: channel-major (C, N, H, W) activations, spatial dim on lanes.
# ----------------------------------------------------------------------------
def conv2d_s2_cm(x_cm, wmat, b, act="relu"):
    """Conv2d(k=3, stride=2, pad=1), channel-major (Cin, N, H, W) input.

    wmat: pre-packed (Cout, 9*Cin) bf16 with column order (kh, kw, ci).
    Output: (Cout, N, H/2, W/2) bf16 -- lane-dense stores over N*OH*OW.
    """
    Cin, N, H, W = x_cm.shape
    Cout = wmat.shape[0]
    OH, OW = H // 2, W // 2
    xb = x_cm.astype(jnp.bfloat16)
    xp = jnp.pad(xb, ((0, 0), (0, 0), (1, 1), (1, 1)))
    cols = [xp[:, :, kh:kh + 2 * OH:2, kw:kw + 2 * OW:2]
            for kh in range(3) for kw in range(3)]
    patches = jnp.stack(cols, axis=0).reshape(9 * Cin, N * OH * OW)
    y = matmul_bias_act(wmat, patches, b, act=act, bias_axis=0,
                        out_dtype=jnp.bfloat16)
    return y.reshape(Cout, N, OH, OW)


def conv_transpose2d_s2_cm(x_cm, wmat, b, act="relu", out_dtype=jnp.bfloat16):
    """ConvTranspose2d(k=4, stride=2, pad=1), channel-major (Cin, N, H, W).

    wmat: pre-packed (16*Cout, Cin) bf16 with row order (kh, kw, co).
    One FLOP-exact matmul producing the bf16 scatter slab (lane-dense over
    N*H*W), then the overlapped 4x4 scatter reduces to per-parity sums of two
    shifted slabs (XLA glue, fused bias + activation at the end).
    """
    Cin, N, H, W = x_cm.shape
    Cout = wmat.shape[0] // 16
    xm = x_cm.reshape(Cin, N * H * W)
    s = matmul_bias_act(wmat, xm, None, act="none", bias_axis=0,
                        out_dtype=jnp.bfloat16)
    s = s.reshape(4, 4, Cout, N, H, W)                    # (kh, kw, co, n, h, w)
    f32 = lambda a: a.astype(jnp.float32)

    # rows: out(2y)   = S[kh=1, ih=y] + S[kh=3, ih=y-1]
    #       out(2y+1) = S[kh=2, ih=y] + S[kh=0, ih=y+1]
    zrow = jnp.zeros_like(s[3][:, :, :, :1, :])
    s3 = jnp.concatenate([zrow, s[3][:, :, :, :-1, :]], axis=3)
    s0 = jnp.concatenate([s[0][:, :, :, 1:, :], zrow], axis=3)
    even_h = f32(s[1]) + f32(s3)                          # (4, Cout, N, H, W)
    odd_h = f32(s[2]) + f32(s0)
    t = jnp.stack([even_h, odd_h], axis=4)                # (4, Cout, N, H, 2, W)

    # columns: same combination along W / kw
    zcol = jnp.zeros_like(t[3][..., :1])
    t3 = jnp.concatenate([zcol, t[3][..., :-1]], axis=-1)
    t0 = jnp.concatenate([t[0][..., 1:], zcol], axis=-1)
    even_w = t[1] + t3                                    # (Cout, N, H, 2, W)
    odd_w = t[2] + t0
    y = jnp.stack([even_w, odd_w], axis=-1)               # (Cout, N, H, 2, W, 2)
    y = y.reshape(Cout, N, 2 * H, 2 * W)
    y = y + b.astype(jnp.float32).reshape(Cout, 1, 1, 1)
    y = _apply_act(y, act)
    return y.astype(out_dtype)


# ----------------------------------------------------------------------------
# Parameter init (deterministic, PyTorch-like uniform(-1/sqrt(fan_in), ...))
# ----------------------------------------------------------------------------
def _u(key, shape, fan_in):
    bound = 1.0 / float(fan_in) ** 0.5
    return jax.random.uniform(key, shape, jnp.float32, -bound, bound)


def init_params(key, latent_dim):
    ks = jax.random.split(key, 32)
    ki = iter(range(32))
    p = {}
    enc_ch = [(1, 4), (4, 16), (16, 64), (64, 256), (256, 1024)]
    for i, (cin, cout) in enumerate(enc_ch, start=1):
        fan = cin * 9
        p[f"enc_conv{i}_w"] = _u(ks[next(ki)], (cout, cin, 3, 3), fan)
        p[f"enc_conv{i}_b"] = _u(ks[next(ki)], (cout,), fan)
    flat = 1024 * 8 * 8
    p["fc_mu_w"] = _u(ks[next(ki)], (latent_dim, flat), flat)
    p["fc_mu_b"] = _u(ks[next(ki)], (latent_dim,), flat)
    p["fc_logvar_w"] = _u(ks[next(ki)], (latent_dim, flat), flat)
    p["fc_logvar_b"] = _u(ks[next(ki)], (latent_dim,), flat)
    p["l2_reg_w"] = _u(ks[next(ki)], (1, flat), flat)
    p["dec_fc_w"] = _u(ks[next(ki)], (flat, latent_dim), latent_dim)
    p["dec_fc_b"] = _u(ks[next(ki)], (flat,), latent_dim)
    # ConvTranspose2d weight layout: (Cin, Cout, 4, 4)
    dec_ch = [("5", 1024, 256), ("4", 256, 64), ("3", 64, 16),
              ("2", 16, 4), ("1", 4, 1)]
    for name, cin, cout in dec_ch:
        fan = cout * 16
        p[f"dec_conv{name}_w"] = _u(ks[next(ki)], (cin, cout, 4, 4), fan)
        p[f"dec_conv{name}_b"] = _u(ks[next(ki)], (cout,), fan)
    return p


def pack_params(params):
    """One-time weight packing (transpose/reshape/cast to bf16) outside the jit."""
    pp = {}
    for i in range(1, 6):
        w = params[f"enc_conv{i}_w"]                      # (Cout, Cin, 3, 3)
        cout, cin = w.shape[0], w.shape[1]
        # channel-major matmul LHS: (Cout, 9*Cin), column order (kh, kw, ci)
        pp[f"enc_conv{i}_w"] = (jnp.transpose(w, (0, 2, 3, 1))
                                .reshape(cout, 9 * cin).astype(jnp.bfloat16))
        pp[f"enc_conv{i}_b"] = params[f"enc_conv{i}_b"].astype(jnp.float32)
    # fused mu/logvar linear: (flat, 2*latent)
    w_cat = jnp.concatenate([params["fc_mu_w"], params["fc_logvar_w"]], axis=0)
    pp["fc_w"] = jnp.transpose(w_cat).astype(jnp.bfloat16)
    pp["fc_b"] = jnp.concatenate([params["fc_mu_b"],
                                  params["fc_logvar_b"]]).astype(jnp.float32)
    pp["dec_fc_w"] = jnp.transpose(params["dec_fc_w"]).astype(jnp.bfloat16)
    pp["dec_fc_b"] = params["dec_fc_b"].astype(jnp.float32)
    for name in ("5", "4", "3", "2", "1"):
        w = params[f"dec_conv{name}_w"]                   # (Cin, Cout, 4, 4)
        cin, cout = w.shape[0], w.shape[1]
        # channel-major scatter LHS: (16*Cout, Cin), row order (kh, kw, co);
        # no spatial flip (matches PyTorch ConvTranspose2d semantics).
        pp[f"dec_conv{name}_w"] = (jnp.transpose(w, (2, 3, 1, 0))
                                   .reshape(16 * cout, cin).astype(jnp.bfloat16))
        pp[f"dec_conv{name}_b"] = params[f"dec_conv{name}_b"].astype(jnp.float32)
    # l2 penalty depends only on a constant parameter -> computed once here.
    pp["l2_loss"] = 0.001 * sumsq_pallas(params["l2_reg_w"])
    return pp


# ----------------------------------------------------------------------------
# Full VAE forward (takes pre-packed params)
# ----------------------------------------------------------------------------
@jax.jit
def vae_forward(x_nchw, pp, eps):
    latent = eps.shape[1]
    N = x_nchw.shape[0]
    # channel-major (C, N, H, W) activations: spatial dim stays on the lanes
    x = jnp.transpose(x_nchw, (1, 0, 2, 3)).astype(jnp.bfloat16)
    # ----- Encoder -----
    for i in range(1, 6):
        x = conv2d_s2_cm(x, pp[f"enc_conv{i}_w"], pp[f"enc_conv{i}_b"], act="relu")
        # TODO(synk): nn.Dropout(p=0.5) is eval-mode identity here.
    # x: (1024, N, 8, 8) bf16 -> PyTorch flatten order (n, c*h*w)
    x_flat = jnp.transpose(x, (1, 0, 2, 3)).reshape(N, -1)
    # fused fc_mu + fc_logvar; split-K only on 2-TC (v7x-like) parts
    ml = matmul_bias_act(x_flat, pp["fc_w"], pp["fc_b"], act="none",
                         out_dtype=jnp.float32, split_k=_FC_SPLIT_K)
    mu, logvar = ml[:, :latent], ml[:, latent:]
    # ----- Reparameterize (tiny; plain jnp) -----
    z = mu + eps * jnp.exp(0.5 * logvar)
    # ----- Decoder -----
    h = matmul_bias_act(z, pp["dec_fc_w"], pp["dec_fc_b"], act="none",
                        out_dtype=jnp.bfloat16)            # (N, 1024*8*8)
    h = jnp.transpose(h.reshape(N, 1024, 8, 8), (1, 0, 2, 3))   # channel-major
    h = conv_transpose2d_s2_cm(h, pp["dec_conv5_w"], pp["dec_conv5_b"], "relu")
    h = conv_transpose2d_s2_cm(h, pp["dec_conv4_w"], pp["dec_conv4_b"], "relu")
    h = conv_transpose2d_s2_cm(h, pp["dec_conv3_w"], pp["dec_conv3_b"], "relu")
    h = conv_transpose2d_s2_cm(h, pp["dec_conv2_w"], pp["dec_conv2_b"], "relu")
    h = conv_transpose2d_s2_cm(h, pp["dec_conv1_w"], pp["dec_conv1_b"], "sigmoid",
                               out_dtype=jnp.float32)       # (1, N, 256, 256)
    x_recon = jnp.transpose(h, (1, 0, 2, 3))                # -> (N, 1, 256, 256)
    return x_recon, mu, logvar, pp["l2_loss"]


# ----------------------------------------------------------------------------
if __name__ == "__main__":
    latent_dim = 32
    key = jax.random.PRNGKey(0)
    k_params, k_x, k_eps = jax.random.split(key, 3)

    params = init_params(k_params, latent_dim)
    packed = pack_params(params)                           # one-time weight packing

    # Forward requires 1x256x256 images (5 stride-2 convs -> 1024x8x8 flatten).
    x = jax.random.normal(k_x, (2, 1, 256, 256), jnp.float32)
    eps = jax.random.normal(k_eps, (2, latent_dim), jnp.float32)

    x_recon, mu, logvar, l2_loss = vae_forward(x, packed, eps)
    jax.block_until_ready((x_recon, mu, logvar, l2_loss))

    assert x_recon.shape == (2, 1, 256, 256)
    assert mu.shape == (2, latent_dim)
    assert logvar.shape == (2, latent_dim)
    assert l2_loss.shape == ()
    assert bool(jnp.all(jnp.isfinite(x_recon)))
    print("KERNEL_OK")
</pallas_src>

<mosaic_0001>
module attributes {stable_mosaic.version = 11 : i64} {
  func.func @_sumsq_kernel(%arg0: memref<1x65536xf32, #tpu.memory_space<vmem>>, %arg1: memref<1xf32, #tpu.memory_space<smem>>) attributes {dimension_semantics = [], scalar_prefetch = 0 : i64, scratch_operands = 0 : i64, tpu.core_type = #tpu.core_type<tc>} {
    %c0 = arith.constant 0 : index
    %c0_0 = arith.constant 0 : index
    %0 = vector.load %arg0[%c0, %c0_0] : memref<1x65536xf32, #tpu.memory_space<vmem>>, vector<1x65536xf32>
    %c0_1 = arith.constant 0 : index
    %c0_2 = arith.constant 0 : index
    %1 = vector.load %arg0[%c0_1, %c0_2] : memref<1x65536xf32, #tpu.memory_space<vmem>>, vector<1x65536xf32>
    %2 = arith.mulf %0, %1 : vector<1x65536xf32>
    %3 = vector.shape_cast %2 : vector<1x65536xf32> to vector<1x1x65536xf32>
    %cst = arith.constant dense<0.000000e+00> : vector<1xf32>
    %4 = vector.multi_reduction <add>, %3, %cst [1, 2] : vector<1x1x65536xf32> to vector<1xf32>
    %5 = vector.shape_cast %4 : vector<1xf32> to vector<1x1x1xf32>
    %6 = vector.extract %5[0, 0, 0] : f32 from vector<1x1x1xf32>
    %c0_3 = arith.constant 0 : index
    %7 = memref.load %arg1[%c0_3] : memref<1xf32, #tpu.memory_space<smem>>
    memref.store %6, %arg1[%c0_3] : memref<1xf32, #tpu.memory_space<smem>>
    return
  }
}

</mosaic_0001>

<llo_original>
// kernel: tpu_custom_call.1
$region0: #{tpu_custom_call.1}
  #allocation0 [shape = 'u32[]', space=smem, size = 0x4, offset = 0x4, fixed_abs, tag = 'smem constant byte address 0x4 - core index']
  #allocation1 [shape = 'u32[144,128]{1,0:T(1,128)}', space=vmem, size = 0x12000, scoped, tag = 'internal scratch']
  %s0 = inlined_call_operand.hbm [shape: f32[1,65536], index: 0, kind: input, shape index: {}]
  %s1 = inlined_call_operand.hbm [shape: f32[1], index: 1, kind: output, shape index: {}]
  %s2 = sld [smem:[#allocation0]]
  $region18: #{tpu_custom_call.1} parent=0
    _
  %s4 = ssub.s32 1, %s2
  %s5 = scalar_select 0, %s4, %s2
  $region1: #{tpu_custom_call.1} parent=0
    #allocation2 [shape = 'u8[262144]{0}', space=vmem, size = 0x40000, scoped, tag = 'input window, operand 0, single buffered']
    #allocation3 [shape = 's32[1]{0}', space=sflag, size = 0x4, scoped, tag = 'scoped memory for tpu_custom_call.1']
    #allocation4 [shape = 's32[1]{0}', space=sflag, size = 0x4, scoped, tag = 'scoped memory for tpu_custom_call.1']
    #allocation5 [shape = 'u8[512]{0}', space=smem, size = 0x200, scoped, tag = 'output window, operand 0, single buffered']
    %6 = vsyncpa [#allocation3], 0
    %7 = vsyncpa [#allocation4], 0
    // Predicated region
    $region2: #{tpu_custom_call.1} parent=1 // pred_check
      _
    $region3: #{tpu_custom_call.1} parent=1 // pred_check_branch
      %9 = sbr.rel (0) target = $region5
    $region4: #{tpu_custom_call.1} parent=1 // pred_region
      %s11 = ssub.s32 8192, 8192
      %12 = vsyncadd [#allocation3], %s11
      %s14 = sshll.u32 [#allocation2], 4
      %s15 = int_to_ptr.vmem [resolvable:$true] %s14
      %17 = dma.hbm_to_vmem [thread:$0]  %s0, 8192, %s15, [#allocation3]
    $region5: #{tpu_custom_call.1} parent=1 // pred_fallthru
      _
    // Predicated region
    $region6: #{tpu_custom_call.1} parent=1 // pred_check
      _
    $region7: #{tpu_custom_call.1} parent=1 // pred_check_branch
      %19 = sbr.rel (0) target = $region9
    $region8: #{tpu_custom_call.1} parent=1 // pred_region
      %20 = dma.done [#allocation3], 8192
    $region9: #{tpu_custom_call.1} parent=1 // pred_fallthru
      _
    %v21 = vld [vmem:[#allocation2] sm:$0xff]
    %v22 = vld [vmem:[#allocation2 + $0x8] sm:$0xff]
    %v23 = vld [vmem:[#allocation2 + $0x10] sm:$0xff]
    %v24 = vld [vmem:[#allocation2 + $0x18] sm:$0xff]
    %v25 = vld [vmem:[#allocation2 + $0x20] sm:$0xff]
    %v26 = vld [vmem:[#allocation2 + $0x28] sm:$0xff]
    %v27 = vld [vmem:[#allocation2 + $0x30] sm:$0xff]
    %v28 = vld [vmem:[#allocation2 + $0x38] sm:$0xff]
    %v29 = vld [vmem:[#allocation2 + $0x40] sm:$0xff]
    %v30 = vld [vmem:[#allocation2 + $0x48] sm:$0xff]
    %v31 = vld [vmem:[#allocation2 + $0x50] sm:$0xff]
    %v32 = vld [vmem:[#allocation2 + $0x58] sm:$0xff]
    %v33 = vld [vmem:[#allocation2 + $0x60] sm:$0xff]
    %v34 = vld [vmem:[#allocation2 + $0x68] sm:$0xff]
    %v35 = vld [vmem:[#allocation2 + $0x70] sm:$0xff]
    %v36 = vld [vmem:[#allocation2 + $0x78] sm:$0xff]
    %v37 = vld [vmem:[#allocation2 + $0x80] sm:$0xff]
    %v38 = vld [vmem:[#allocation2 + $0x88] sm:$0xff]
    %v39 = vld [vmem:[#allocation2 + $0x90] sm:$0xff]
    %v40 = vld [vmem:[#allocation2 + $0x98] sm:$0xff]
    %v41 = vld [vmem:[#allocation2 + $0xa0] sm:$0xff]
    %v42 = vld [vmem:[#allocation2 + $0xa8] sm:$0xff]
    %v43 = vld [vmem:[#allocation2 + $0xb0] sm:$0xff]
    %v44 = vld [vmem:[#allocation2 + $0xb8] sm:$0xff]
    %v45 = vld [vmem:[#allocation2 + $0xc0] sm:$0xff]
    %v46 = vld [vmem:[#allocation2 + $0xc8] sm:$0xff]
    %v47 = vld [vmem:[#allocation2 + $0xd0] sm:$0xff]
    %v48 = vld [vmem:[#allocation2 + $0xd8] sm:$0xff]
    %v49 = vld [vmem:[#allocation2 + $0xe0] sm:$0xff]
    %v50 = vld [vmem:[#allocation2 + $0xe8] sm:$0xff]
    %v51 = vld [vmem:[#allocation2 + $0xf0] sm:$0xff]
    %v52 = vld [vmem:[#allocation2 + $0xf8] sm:$0xff]
    %v53 = vld [vmem:[#allocation2 + $0x100] sm:$0xff]
    %v54 = vld [vmem:[#allocation2 + $0x108] sm:$0xff]
    %v55 = vld [vmem:[#allocation2 + $0x110] sm:$0xff]
    %v56 = vld [vmem:[#allocation2 + $0x118] sm:$0xff]
    %v57 = vld [vmem:[#allocation2 + $0x120] sm:$0xff]
    %v58 = vld [vmem:[#allocation2 + $0x128] sm:$0xff]
    %v59 = vld [vmem:[#allocation2 + $0x130] sm:$0xff]
    %v60 = vld [vmem:[#allocation2 + $0x138] sm:$0xff]
    %v61 = vld [vmem:[#allocation2 + $0x140] sm:$0xff]
    %v62 = vld [vmem:[#allocation2 + $0x148] sm:$0xff]
    %v63 = vld [vmem:[#allocation2 + $0x150] sm:$0xff]
    %v64 = vld [vmem:[#allocation2 + $0x158] sm:$0xff]
    %v65 = vld [vmem:[#allocation2 + $0x160] sm:$0xff]
    %v66 = vld [vmem:[#allocation2 + $0x168] sm:$0xff]
    %v67 = vld [vmem:[#allocation2 + $0x170] sm:$0xff]
    %v68 = vld [vmem:[#allocation2 + $0x178] sm:$0xff]
    %v69 = vld [vmem:[#allocation2 + $0x180] sm:$0xff]
    %v70 = vld [vmem:[#allocation2 + $0x188] sm:$0xff]
    %v71 = vld [vmem:[#allocation2 + $0x190] sm:$0xff]
    %v72 = vld [vmem:[#allocation2 + $0x198] sm:$0xff]
    %v73 = vld [vmem:[#allocation2 + $0x1a0] sm:$0xff]
    %v74 = vld [vmem:[#allocation2 + $0x1a8] sm:$0xff]
    %v75 = vld [vmem:[#allocation2 + $0x1b0] sm:$0xff]
    %v76 = vld [vmem:[#allocation2 + $0x1b8] sm:$0xff]
    %v77 = vld [vmem:[#allocation2 + $0x1c0] sm:$0xff]
    %v78 = vld [vmem:[#allocation2 + $0x1c8] sm:$0xff]
    %v79 = vld [vmem:[#allocation2 + $0x1d0] sm:$0xff]
    %v80 = vld [vmem:[#allocation2 + $0x1d8] sm:$0xff]
    %v81 = vld [vmem:[#allocation2 + $0x1e0] sm:$0xff]
    %v82 = vld [vmem:[#allocation2 + $0x1e8] sm:$0xff]
    %v83 = vld [vmem:[#allocation2 + $0x1f0] sm:$0xff]
    %v84 = vld [vmem:[#allocation2 + $0x1f8] sm:$0xff]
    %v85 = vmul.f32 %v21, %v21
    %v86 = vmul.f32 %v22, %v22
    %v87 = vmul.f32 %v23, %v23
    %v88 = vmul.f32 %v24, %v24
    %v89 = vmul.f32 %v25, %v25
    %v90 = vmul.f32 %v26, %v26
    %v91 = vmul.f32 %v27, %v27
    %v92 = vmul.f32 %v28, %v28
    %v93 = vmul.f32 %v29, %v29
    %v94 = vmul.f32 %v30, %v30
    %v95 = vmul.f32 %v31, %v31
    %v96 = vmul.f32 %v32, %v32
    %v97 = vmul.f32 %v33, %v33
    %v98 = vmul.f32 %v34, %v34
    %v99 = vmul.f32 %v35, %v35
    %v100 = vmul.f32 %v36, %v36
    %v101 = vmul.f32 %v37, %v37
    %v102 = vmul.f32 %v38, %v38
    %v103 = vmul.f32 %v39, %v39
    %v104 = vmul.f32 %v40, %v40
    %v105 = vmul.f32 %v41, %v41
    %v106 = vmul.f32 %v42, %v42
    %v107 = vmul.f32 %v43, %v43
    %v108 = vmul.f32 %v44, %v44
    %v109 = vmul.f32 %v45, %v45
    %v110 = vmul.f32 %v46, %v46
    %v111 = vmul.f32 %v47, %v47
    %v112 = vmul.f32 %v48, %v48
    %v113 = vmul.f32 %v49, %v49
    %v114 = vmul.f32 %v50, %v50
    %v115 = vmul.f32 %v51, %v51
    %v116 = vmul.f32 %v52, %v52
    %v117 = vmul.f32 %v53, %v53
    %v118 = vmul.f32 %v54, %v54
    %v119 = vmul.f32 %v55, %v55
    %v120 = vmul.f32 %v56, %v56
    %v121 = vmul.f32 %v57, %v57
    %v122 = vmul.f32 %v58, %v58
    %v123 = vmul.f32 %v59, %v59
    %v124 = vmul.f32 %v60, %v60
    %v125 = vmul.f32 %v61, %v61
    %v126 = vmul.f32 %v62, %v62
    %v127 = vmul.f32 %v63, %v63
    %v128 = vmul.f32 %v64, %v64
    %v129 = vmul.f32 %v65, %v65
    %v130 = vmul.f32 %v66, %v66
    %v131 = vmul.f32 %v67, %v67
    %v132 = vmul.f32 %v68, %v68
    %v133 = vmul.f32 %v69, %v69
    %v134 = vmul.f32 %v70, %v70
    %v135 = vmul.f32 %v71, %v71
    %v136 = vmul.f32 %v72, %v72
    %v137 = vmul.f32 %v73, %v73
    %v138 = vmul.f32 %v74, %v74
    %v139 = vmul.f32 %v75, %v75
    %v140 = vmul.f32 %v76, %v76
    %v141 = vmul.f32 %v77, %v77
    %v142 = vmul.f32 %v78, %v78
    %v143 = vmul.f32 %v79, %v79
    %v144 = vmul.f32 %v80, %v80
    %v145 = vmul.f32 %v81, %v81
    %v146 = vmul.f32 %v82, %v82
    %v147 = vmul.f32 %v83, %v83
    %v148 = vmul.f32 %v84, %v84
    %v213 = vlaneseq
    %v214 = vshrl.u32 %v213, 7
    %v215 = vsub.s32 0, %v214
    %v216 = vrot.slane %v85, %v215
    %v217 = vlaneseq
    %v218 = vshrl.u32 %v217, 7
    %v219 = vsub.s32 1, %v218
    %v220 = vrot.slane %v85, %v219
    %v221 = vlaneseq
    %v222 = vshrl.u32 %v221, 7
    %v223 = vsub.s32 2, %v222
    %v224 = vrot.slane %v85, %v223
    %v225 = vlaneseq
    %v226 = vshrl.u32 %v225, 7
    %v227 = vsub.s32 3, %v226
    %v228 = vrot.slane %v85, %v227
    %v229 = vlaneseq
    %v230 = vshrl.u32 %v229, 7
    %v231 = vsub.s32 4, %v230
    %v232 = vrot.slane %v85, %v231
    %v233 = vlaneseq
    %v234 = vshrl.u32 %v233, 7
    %v235 = vsub.s32 5, %v234
    %v236 = vrot.slane %v85, %v235
    %v237 = vlaneseq
    %v238 = vshrl.u32 %v237, 7
    %v239 = vsub.s32 6, %v238
    %v240 = vrot.slane %v85, %v239
    %v241 = vlaneseq
    %v242 = vshrl.u32 %v241, 7
    %v243 = vsub.s32 7, %v242
    %v244 = vrot.slane %v85, %v243
    %v245 = vlaneseq
    %v246 = vshrl.u32 %v245, 7
    %v247 = vsub.s32 0, %v246
    %v248 = vrot.slane %v86, %v247
    %v249 = vlaneseq
    %v250 = vshrl.u32 %v249, 7
    %v251 = vsub.s32 1, %v250
    %v252 = vrot.slane %v86, %v251
    %v253 = vlaneseq
    %v254 = vshrl.u32 %v253, 7
    %v255 = vsub.s32 2, %v254
    %v256 = vrot.slane %v86, %v255
    %v257 = vlaneseq
    %v258 = vshrl.u32 %v257, 7
    %v259 = vsub.s32 3, %v258
    %v260 = vrot.slane %v86, %v259
    %v261 = vlaneseq
    %v262 = vshrl.u32 %v261, 7
    %v263 = vsub.s32 4, %v262
    %v264 = vrot.slane %v86, %v263
    %v265 = vlaneseq
    %v266 = vshrl.u32 %v265, 7
    %v267 = vsub.s32 5, %v266
    %v268 = vrot.slane %v86, %v267
    %v269 = vlaneseq
    %v270 = vshrl.u32 %v269, 7
    %v271 = vsub.s32 6, %v270
    %v272 = vrot.slane %v86, %v271
    %v273 = vlaneseq
    %v274 = vshrl.u32 %v273, 7
    %v275 = vsub.s32 7, %v274
    %v276 = vrot.slane %v86, %v275
    %v277 = vlaneseq
    %v278 = vshrl.u32 %v277, 7
    %v279 = vsub.s32 0, %v278
    %v280 = vrot.slane %v87, %v279
    %v281 = vlaneseq
    %v282 = vshrl.u32 %v281, 7
    %v283 = vsub.s32 1, %v282
    %v284 = vrot.slane %v87, %v283
    %v285 = vlaneseq
    %v286 = vshrl.u32 %v285, 7
    %v287 = vsub.s32 2, %v286
    %v288 = vrot.slane %v87, %v287
    %v289 = vlaneseq
    %v290 = vshrl.u32 %v289, 7
    %v291 = vsub.s32 3, %v290
    %v292 = vrot.slane %v87, %v291
    %v293 = vlaneseq
    %v294 = vshrl.u32 %v293, 7
    %v295 = vsub.s32 4, %v294
    %v296 = vrot.slane %v87, %v295
    %v297 = vlaneseq
    %v298 = vshrl.u32 %v297, 7
    %v299 = vsub.s32 5, %v298
    %v300 = vrot.slane %v87, %v299
    %v301 = vlaneseq
    %v302 = vshrl.u32 %v301, 7
    %v303 = vsub.s32 6, %v302
    %v304 = vrot.slane %v87, %v303
    %v305 = vlaneseq
    %v306 = vshrl.u32 %v305, 7
    %v307 = vsub.s32 7, %v306
    %v308 = vrot.slane %v87, %v307
    %v309 = vlaneseq
    %v310 = vshrl.u32 %v309, 7
    %v311 = vsub.s32 0, %v310
    %v312 = vrot.slane %v88, %v311
    %v313 = vlaneseq
    %v314 = vshrl.u32 %v313, 7
    %v315 = vsub.s32 1, %v314
    %v316 = vrot.slane %v88, %v315
    %v317 = vlaneseq
    %v318 = vshrl.u32 %v317, 7
    %v319 = vsub.s32 2, %v318
    %v320 = vrot.slane %v88, %v319
    %v321 = vlaneseq
    %v322 = vshrl.u32 %v321, 7
    %v323 = vsub.s32 3, %v322
    %v324 = vrot.slane %v88, %v323
    %v325 = vlaneseq
    %v326 = vshrl.u32 %v325, 7
    %v327 = vsub.s32 4, %v326
    %v328 = vrot.slane %v88, %v327
    %v329 = vlaneseq
    %v330 = vshrl.u32 %v329, 7
    %v331 = vsub.s32 5, %v330
    %v332 = vrot.slane %v88, %v331
    %v333 = vlaneseq
    %v334 = vshrl.u32 %v333, 7
    %v335 = vsub.s32 6, %v334
    %v336 = vrot.slane %v88, %v335
    %v337 = vlaneseq
    %v338 = vshrl.u32 %v337, 7
    %v339 = vsub.s32 7, %v338
    %v340 = vrot.slane %v88, %v339
    %v341 = vlaneseq
    %v342 = vshrl.u32 %v341, 7
    %v343 = vsub.s32 0, %v342
    %v344 = vrot.slane %v89, %v343
    %v345 = vlaneseq
    %v346 = vshrl.u32 %v345, 7
    %v347 = vsub.s32 1, %v346
    %v348 = vrot.slane %v89, %v347
    %v349 = vlaneseq
    %v350 = vshrl.u32 %v349, 7
    %v351 = vsub.s32 2, %v350
    %v352 = vrot.slane %v89, %v351
    %v353 = vlaneseq
    %v354 = vshrl.u32 %v353, 7
    %v355 = vsub.s32 3, %v354
    %v356 = vrot.slane %v89, %v355
    %v357 = vlaneseq
    %v358 = vshrl.u32 %v357, 7
    %v359 = vsub.s32 4, %v358
    %v360 = vrot.slane %v89, %v359
    %v361 = vlaneseq
    %v362 = vshrl.u32 %v361, 7
    %v363 = vsub.s32 5, %v362
    %v364 = vrot.slane %v89, %v363
    %v365 = vlaneseq
    %v366 = vshrl.u32 %v365, 7
    %v367 = vsub.s32 6, %v366
    %v368 = vrot.slane %v89, %v367
    %v369 = vlaneseq
    %v370 = vshrl.u32 %v369, 7
    %v371 = vsub.s32 7, %v370
    %v372 = vrot.slane %v89, %v371
    %v373 = vlaneseq
    %v374 = vshrl.u32 %v373, 7
    %v375 = vsub.s32 0, %v374
    %v376 = vrot.slane %v90, %v375
    %v377 = vlaneseq
    %v378 = vshrl.u32 %v377, 7
    %v379 = vsub.s32 1, %v378
    %v380 = vrot.slane %v90, %v379
    %v381 = vlaneseq
    %v382 = vshrl.u32 %v381, 7
    %v383 = vsub.s32 2, %v382
    %v384 = vrot.slane %v90, %v383
    %v385 = vlaneseq
    %v386 = vshrl.u32 %v385, 7
    %v387 = vsub.s32 3, %v386
    %v388 = vrot.slane %v90, %v387
    %v389 = vlaneseq
    %v390 = vshrl.u32 %v389, 7
    %v391 = vsub.s32 4, %v390
    %v392 = vrot.slane %v90, %v391
    %v393 = vlaneseq
    %v394 = vshrl.u32 %v393, 7
    %v395 = vsub.s32 5, %v394
    %v396 = vrot.slane %v90, %v395
    %v397 = vlaneseq
    %v398 = vshrl.u32 %v397, 7
    %v399 = vsub.s32 6, %v398
    %v400 = vrot.slane %v90, %v399
    %v401 = vlaneseq
    %v402 = vshrl.u32 %v401, 7
    %v403 = vsub.s32 7, %v402
    %v404 = vrot.slane %v90, %v403
    %v405 = vlaneseq
    %v406 = vshrl.u32 %v405, 7
    %v407 = vsub.s32 0, %v406
    %v408 = vrot.slane %v91, %v407
    %v409 = vlaneseq
    %v410 = vshrl.u32 %v409, 7
    %v411 = vsub.s32 1, %v410
    %v412 = vrot.slane %v91, %v411
    %v413 = vlaneseq
    %v414 = vshrl.u32 %v413, 7
    %v415 = vsub.s32 2, %v414
    %v416 = vrot.slane %v91, %v415
    %v417 = vlaneseq
    %v418 = vshrl.u32 %v417, 7
    %v419 = vsub.s32 3, %v418
    %v420 = vrot.slane %v91, %v419
    %v421 = vlaneseq
    %v422 = vshrl.u32 %v421, 7
    %v423 = vsub.s32 4, %v422
    %v424 = vrot.slane %v91, %v423
    %v425 = vlaneseq
    %v426 = vshrl.u32 %v425, 7
    %v427 = vsub.s32 5, %v426
    %v428 = vrot.slane %v91, %v427
    %v429 = vlaneseq
    %v430 = vshrl.u32 %v429, 7
    %v431 = vsub.s32 6, %v430
    %v432 = vrot.slane %v91, %v431
    %v433 = vlaneseq
    %v434 = vshrl.u32 %v433, 7
    %v435 = vsub.s32 7, %v434
    %v436 = vrot.slane %v91, %v435
    %v437 = vlaneseq
    %v438 = vshrl.u32 %v437, 7
    %v439 = vsub.s32 0, %v438
    %v440 = vrot.slane %v92, %v439
    %v441 = vlaneseq
    %v442 = vshrl.u32 %v441, 7
    %v443 = vsub.s32 1, %v442
    %v444 = vrot.slane %v92, %v443
    %v445 = vlaneseq
    %v446 = vshrl.u32 %v445, 7
    %v447 = vsub.s32 2, %v446
    %v448 = vrot.slane %v92, %v447
    %v449 = vlaneseq
    %v450 = vshrl.u32 %v449, 7
    %v451 = vsub.s32 3, %v450
    %v452 = vrot.slane %v92, %v451
    %v453 = vlaneseq
    %v454 = vshrl.u32 %v453, 7
    %v455 = vsub.s32 4, %v454
    %v456 = vrot.slane %v92, %v455
    %v457 = vlaneseq
    %v458 = vshrl.u32 %v457, 7
    %v459 = vsub.s32 5, %v458
    %v460 = vrot.slane %v92, %v459
    %v461 = vlaneseq
    %v462 = vshrl.u32 %v461, 7
    %v463 = vsub.s32 6, %v462
    %v464 = vrot.slane %v92, %v463
    %v465 = vlaneseq
    %v466 = vshrl.u32 %v465, 7
    %v467 = vsub.s32 7, %v466
    %v468 = vrot.slane %v92, %v467
    %v469 = vlaneseq
    %v470 = vshrl.u32 %v469, 7
    %v471 = vsub.s32 0, %v470
    %v472 = vrot.slane %v93, %v471
    %v473 = vlaneseq
    %v474 = vshrl.u32 %v473, 7
    %v475 = vsub.s32 1, %v474
    %v476 = vrot.slane %v93, %v475
    %v477 = vlaneseq
    %v478 = vshrl.u32 %v477, 7
    %v479 = vsub.s32 2, %v478
    %v480 = vrot.slane %v93, %v479
    %v481 = vlaneseq
    %v482 = vshrl.u32 %v481, 7
    %v483 = vsub.s32 3, %v482
    %v484 = vrot.slane %v93, %v483
    %v485 = vlaneseq
    %v486 = vshrl.u32 %v485, 7
    %v487 = vsub.s32 4, %v486
    %v488 = vrot.slane %v93, %v487
    %v489 = vlaneseq
    %v490 = vshrl.u32 %v489, 7
    %v491 = vsub.s32 5, %v490
    %v492 = vrot.slane %v93, %v491
    %v493 = vlaneseq
    %v494 = vshrl.u32 %v493, 7
    %v495 = vsub.s32 6, %v494
    %v496 = vrot.slane %v93, %v495
    %v497 = vlaneseq
    %v498 = vshrl.u32 %v497, 7
    %v499 = vsub.s32 7, %v498
    %v500 = vrot.slane %v93, %v499
    %v501 = vlaneseq
    %v502 = vshrl.u32 %v501, 7
    %v503 = vsub.s32 0, %v502
    %v504 = vrot.slane %v94, %v503
    %v505 = vlaneseq
    %v506 = vshrl.u32 %v505, 7
    %v507 = vsub.s32 1, %v506
    %v508 = vrot.slane %v94, %v507
    %v509 = vlaneseq
    %v510 = vshrl.u32 %v509, 7
    %v511 = vsub.s32 2, %v510
    %v512 = vrot.slane %v94, %v511
    %v513 = vlaneseq
    %v514 = vshrl.u32 %v513, 7
    %v515 = vsub.s32 3, %v514
    %v516 = vrot.slane %v94, %v515
    %v517 = vlaneseq
    %v518 = vshrl.u32 %v517, 7
    %v519 = vsub.s32 4, %v518
    %v520 = vrot.slane %v94, %v519
    %v521 = vlaneseq
    %v522 = vshrl.u32 %v521, 7
    %v523 = vsub.s32 5, %v522
    %v524 = vrot.slane %v94, %v523
    %v525 = vlaneseq
    %v526 = vshrl.u32 %v525, 7
    %v527 = vsub.s32 6, %v526
    %v528 = vrot.slane %v94, %v527
    %v529 = vlaneseq
    %v530 = vshrl.u32 %v529, 7
    %v531 = vsub.s32 7, %v530
    %v532 = vrot.slane %v94, %v531
    %v533 = vlaneseq
    %v534 = vshrl.u32 %v533, 7
    %v535 = vsub.s32 0, %v534
    %v536 = vrot.slane %v95, %v535
    %v537 = vlaneseq
    %v538 = vshrl.u32 %v537, 7
    %v539 = vsub.s32 1, %v538
    %v540 = vrot.slane %v95, %v539
    %v541 = vlaneseq
    %v542 = vshrl.u32 %v541, 7
    %v543 = vsub.s32 2, %v542
    %v544 = vrot.slane %v95, %v543
    %v545 = vlaneseq
    %v546 = vshrl.u32 %v545, 7
    %v547 = vsub.s32 3, %v546
    %v548 = vrot.slane %v95, %v547
    %v549 = vlaneseq
    %v550 = vshrl.u32 %v549, 7
    %v551 = vsub.s32 4, %v550
    %v552 = vrot.slane %v95, %v551
    %v553 = vlaneseq
    %v554 = vshrl.u32 %v553, 7
    %v555 = vsub.s32 5, %v554
    %v556 = vrot.slane %v95, %v555
    %v557 = vlaneseq
    %v558 = vshrl.u32 %v557, 7
    %v559 = vsub.s32 6, %v558
    %v560 = vrot.slane %v95, %v559
    %v561 = vlaneseq
    %v562 = vshrl.u32 %v561, 7
    %v563 = vsub.s32 7, %v562
    %v564 = vrot.slane %v95, %v563
    %v565 = vlaneseq
    %v566 = vshrl.u32 %v565, 7
    %v567 = vsub.s32 0, %v566
    %v568 = vrot.slane %v96, %v567
    %v569 = vlaneseq
    %v570 = vshrl.u32 %v569, 7
    %v571 = vsub.s32 1, %v570
    %v572 = vrot.slane %v96, %v571
    %v573 = vlaneseq
    %v574 = vshrl.u32 %v573, 7
    %v575 = vsub.s32 2, %v574
    %v576 = vrot.slane %v96, %v575
    %v577 = vlaneseq
    %v578 = vshrl.u32 %v577, 7
    %v579 = vsub.s32 3, %v578
    %v580 = vrot.slane %v96, %v579
    %v581 = vlaneseq
    %v582 = vshrl.u32 %v581, 7
    %v583 = vsub.s32 4, %v582
    %v584 = vrot.slane %v96, %v583
    %v585 = vlaneseq
    %v586 = vshrl.u32 %v585, 7
    %v587 = vsub.s32 5, %v586
    %v588 = vrot.slane %v96, %v587
    %v589 = vlaneseq
    %v590 = vshrl.u32 %v589, 7
    %v591 = vsub.s32 6, %v590
    %v592 = vrot.slane %v96, %v591
    %v593 = vlaneseq
    %v594 = vshrl.u32 %v593, 7
    %v595 = vsub.s32 7, %v594
    %v596 = vrot.slane %v96, %v595
    %v597 = vlaneseq
    %v598 = vshrl.u32 %v597, 7
    %v599 = vsub.s32 0, %v598
    %v600 = vrot.slane %v97, %v599
    %v601 = vlaneseq
    %v602 = vshrl.u32 %v601, 7
    %v603 = vsub.s32 1, %v602
    %v604 = vrot.slane %v97, %v603
    %v605 = vlaneseq
    %v606 = vshrl.u32 %v605, 7
    %v607 = vsub.s32 2, %v606
    %v608 = vrot.slane %v97, %v607
    %v609 = vlaneseq
    %v610 = vshrl.u32 %v609, 7
    %v611 = vsub.s32 3, %v610
    %v612 = vrot.slane %v97, %v611
    %v613 = vlaneseq
    %v614 = vshrl.u32 %v613, 7
    %v615 = vsub.s32 4, %v614
    %v616 = vrot.slane %v97, %v615
    %v617 = vlaneseq
    %v618 = vshrl.u32 %v617, 7
    %v619 = vsub.s32 5, %v618
    %v620 = vrot.slane %v97, %v619
    %v621 = vlaneseq
    %v622 = vshrl.u32 %v621, 7
    %v623 = vsub.s32 6, %v622
    %v624 = vrot.slane %v97, %v623
    %v625 = vlaneseq
    %v626 = vshrl.u32 %v625, 7
    %v627 = vsub.s32 7, %v626
    %v628 = vrot.slane %v97, %v627
    %v629 = vlaneseq
    %v630 = vshrl.u32 %v629, 7
    %v631 = vsub.s32 0, %v630
    %v632 = vrot.slane %v98, %v631
    %v633 = vlaneseq
    %v634 = vshrl.u32 %v633, 7
    %v635 = vsub.s32 1, %v634
    %v636 = vrot.slane %v98, %v635
    %v637 = vlaneseq
    %v638 = vshrl.u32 %v637, 7
    %v639 = vsub.s32 2, %v638
    %v640 = vrot.slane %v98, %v639
    %v641 = vlaneseq
    %v642 = vshrl.u32 %v641, 7
    %v643 = vsub.s32 3, %v642
    %v644 = vrot.slane %v98, %v643
    %v645 = vlaneseq
    %v646 = vshrl.u32 %v645, 7
    %v647 = vsub.s32 4, %v646
    %v648 = vrot.slane %v98, %v647
    %v649 = vlaneseq
    %v650 = vshrl.u32 %v649, 7
    %v651 = vsub.s32 5, %v650
    %v652 = vrot.slane %v98, %v651
    %v653 = vlaneseq
    %v654 = vshrl.u32 %v653, 7
    %v655 = vsub.s32 6, %v654
    %v656 = vrot.slane %v98, %v655
    %v657 = vlaneseq
    %v658 = vshrl.u32 %v657, 7
    %v659 = vsub.s32 7, %v658
    %v660 = vrot.slane %v98, %v659
    %v661 = vlaneseq
    %v662 = vshrl.u32 %v661, 7
    %v663 = vsub.s32 0, %v662
    %v664 = vrot.slane %v99, %v663
    %v665 = vlaneseq
    %v666 = vshrl.u32 %v665, 7
    %v667 = vsub.s32 1, %v666
    %v668 = vrot.slane %v99, %v667
    %v669 = vlaneseq
    %v670 = vshrl.u32 %v669, 7
    %v671 = vsub.s32 2, %v670
    %v672 = vrot.slane %v99, %v671
    %v673 = vlaneseq
    %v674 = vshrl.u32 %v673, 7
    %v675 = vsub.s32 3, %v674
    %v676 = vrot.slane %v99, %v675
    %v677 = vlaneseq
    %v678 = vshrl.u32 %v677, 7
    %v679 = vsub.s32 4, %v678
    %v680 = vrot.slane %v99, %v679
    %v681 = vlaneseq
    %v682 = vshrl.u32 %v681, 7
    %v683 = vsub.s32 5, %v682
    %v684 = vrot.slane %v99, %v683
    %v685 = vlaneseq
    %v686 = vshrl.u32 %v685, 7
    %v687 = vsub.s32 6, %v686
    %v688 = vrot.slane %v99, %v687
    %v689 = vlaneseq
    %v690 = vshrl.u32 %v689, 7
    %v691 = vsub.s32 7, %v690
    %v692 = vrot.slane %v99, %v691
    %v693 = vlaneseq
    %v694 = vshrl.u32 %v693, 7
    %v695 = vsub.s32 0, %v694
    %v696 = vrot.slane %v100, %v695
    %v697 = vlaneseq
    %v698 = vshrl.u32 %v697, 7
    %v699 = vsub.s32 1, %v698
    %v700 = vrot.slane %v100, %v699
    %v701 = vlaneseq
    %v702 = vshrl.u32 %v701, 7
    %v703 = vsub.s32 2, %v702
    %v704 = vrot.slane %v100, %v703
    %v705 = vlaneseq
    %v706 = vshrl.u32 %v705, 7
    %v707 = vsub.s32 3, %v706
    %v708 = vrot.slane %v100, %v707
    %v709 = vlaneseq
    %v710 = vshrl.u32 %v709, 7
    %v711 = vsub.s32 4, %v710
    %v712 = vrot.slane %v100, %v711
    %v713 = vlaneseq
    %v714 = vshrl.u32 %v713, 7
    %v715 = vsub.s32 5, %v714
    %v716 = vrot.slane %v100, %v715
    %v717 = vlaneseq
    %v718 = vshrl.u32 %v717, 7
    %v719 = vsub.s32 6, %v718
    %v720 = vrot.slane %v100, %v719
    %v721 = vlaneseq
    %v722 = vshrl.u32 %v721, 7
    %v723 = vsub.s32 7, %v722
    %v724 = vrot.slane %v100, %v723
    %v725 = vlaneseq
    %v726 = vshrl.u32 %v725, 7
    %v727 = vsub.s32 0, %v726
    %v728 = vrot.slane %v101, %v727
    %v729 = vlaneseq
    %v730 = vshrl.u32 %v729, 7
    %v731 = vsub.s32 1, %v730
    %v732 = vrot.slane %v101, %v731
    %v733 = vlaneseq
    %v734 = vshrl.u32 %v733, 7
    %v735 = vsub.s32 2, %v734
    %v736 = vrot.slane %v101, %v735
    %v737 = vlaneseq
    %v738 = vshrl.u32 %v737, 7
    %v739 = vsub.s32 3, %v738
    %v740 = vrot.slane %v101, %v739
    %v741 = vlaneseq
    %v742 = vshrl.u32 %v741, 7
    %v743 = vsub.s32 4, %v742
    %v744 = vrot.slane %v101, %v743
    %v745 = vlaneseq
    %v746 = vshrl.u32 %v745, 7
    %v747 = vsub.s32 5, %v746
    %v748 = vrot.slane %v101, %v747
    %v749 = vlaneseq
    %v750 = vshrl.u32 %v749, 7
    %v751 = vsub.s32 6, %v750
    %v752 = vrot.slane %v101, %v751
    %v753 = vlaneseq
    %v754 = vshrl.u32 %v753, 7
    %v755 = vsub.s32 7, %v754
    %v756 = vrot.slane %v101, %v755
    %v757 = vlaneseq
    %v758 = vshrl.u32 %v757, 7
    %v759 = vsub.s32 0, %v758
    %v760 = vrot.slane %v102, %v759
    %v761 = vlaneseq
    %v762 = vshrl.u32 %v761, 7
    %v763 = vsub.s32 1, %v762
    %v764 = vrot.slane %v102, %v763
    %v765 = vlaneseq
    %v766 = vshrl.u32 %v765, 7
    %v767 = vsub.s32 2, %v766
    %v768 = vrot.slane %v102, %v767
    %v769 = vlaneseq
    %v770 = vshrl.u32 %v769, 7
    %v771 = vsub.s32 3, %v770
    %v772 = vrot.slane %v102, %v771
    %v773 = vlaneseq
    %v774 = vshrl.u32 %v773, 7
    %v775 = vsub.s32 4, %v774
    %v776 = vrot.slane %v102, %v775
    %v777 = vlaneseq
    %v778 = vshrl.u32 %v777, 7
    %v779 = vsub.s32 5, %v778
    %v780 = vrot.slane %v102, %v779
    %v781 = vlaneseq
    %v782 = vshrl.u32 %v781, 7
    %v783 = vsub.s32 6, %v782
    %v784 = vrot.slane %v102, %v783
    %v785 = vlaneseq
    %v786 = vshrl.u32 %v785, 7
    %v787 = vsub.s32 7, %v786
    %v788 = vrot.slane %v102, %v787
    %v789 = vlaneseq
    %v790 = vshrl.u32 %v789, 7
    %v791 = vsub.s32 0, %v790
    %v792 = vrot.slane %v103, %v791
    %v793 = vlaneseq
    %v794 = vshrl.u32 %v793, 7
    %v795 = vsub.s32 1, %v794
    %v796 = vrot.slane %v103, %v795
    %v797 = vlaneseq
    %v798 = vshrl.u32 %v797, 7
    %v799 = vsub.s32 2, %v798
    %v800 = vrot.slane %v103, %v799
    %v801 = vlaneseq
    %v802 = vshrl.u32 %v801, 7
    %v803 = vsub.s32 3, %v802
    %v804 = vrot.slane %v103, %v803
    %v805 = vlaneseq
    %v806 = vshrl.u32 %v805, 7
    %v807 = vsub.s32 4, %v806
    %v808 = vrot.slane %v103, %v807
    %v809 = vlaneseq
    %v810 = vshrl.u32 %v809, 7
    %v811 = vsub.s32 5, %v810
    %v812 = vrot.slane %v103, %v811
    %v813 = vlaneseq
    %v814 = vshrl.u32 %v813, 7
    %v815 = vsub.s32 6, %v814
    %v816 = vrot.slane %v103, %v815
    %v817 = vlaneseq
    %v818 = vshrl.u32 %v817, 7
    %v819 = vsub.s32 7, %v818
    %v820 = vrot.slane %v103, %v819
    %v821 = vlaneseq
    %v822 = vshrl.u32 %v821, 7
    %v823 = vsub.s32 0, %v822
    %v824 = vrot.slane %v104, %v823
    %v825 = vlaneseq
    %v826 = vshrl.u32 %v825, 7
    %v827 = vsub.s32 1, %v826
    %v828 = vrot.slane %v104, %v827
    %v829 = vlaneseq
    %v830 = vshrl.u32 %v829, 7
    %v831 = vsub.s32 2, %v830
    %v832 = vrot.slane %v104, %v831
    %v833 = vlaneseq
    %v834 = vshrl.u32 %v833, 7
    %v835 = vsub.s32 3, %v834
    %v836 = vrot.slane %v104, %v835
    %v837 = vlaneseq
    %v838 = vshrl.u32 %v837, 7
    %v839 = vsub.s32 4, %v838
    %v840 = vrot.slane %v104, %v839
    %v841 = vlaneseq
    %v842 = vshrl.u32 %v841, 7
    %v843 = vsub.s32 5, %v842
    %v844 = vrot.slane %v104, %v843
    %v845 = vlaneseq
    %v846 = vshrl.u32 %v845, 7
    %v847 = vsub.s32 6, %v846
    %v848 = vrot.slane %v104, %v847
    %v849 = vlaneseq
    %v850 = vshrl.u32 %v849, 7
    %v851 = vsub.s32 7, %v850
    %v852 = vrot.slane %v104, %v851
    %v853 = vlaneseq
    %v854 = vshrl.u32 %v853, 7
    %v855 = vsub.s32 0, %v854
    %v856 = vrot.slane %v105, %v855
    %v857 = vlaneseq
    %v858 = vshrl.u32 %v857, 7
    %v859 = vsub.s32 1, %v858
    %v860 = vrot.slane %v105, %v859
    %v861 = vlaneseq
    %v862 = vshrl.u32 %v861, 7
    %v863 = vsub.s32 2, %v862
    %v864 = vrot.slane %v105, %v863
    %v865 = vlaneseq
    %v866 = vshrl.u32 %v865, 7
    %v867 = vsub.s32 3, %v866
    %v868 = vrot.slane %v105, %v867
    %v869 = vlaneseq
    %v870 = vshrl.u32 %v869, 7
    %v871 = vsub.s32 4, %v870
    %v872 = vrot.slane %v105, %v871
    %v873 = vlaneseq
    %v874 = vshrl.u32 %v873, 7
    %v875 = vsub.s32 5, %v874
    %v876 = vrot.slane %v105, %v875
    %v877 = vlaneseq
    %v878 = vshrl.u32 %v877, 7
    %v879 = vsub.s32 6, %v878
    %v880 = vrot.slane %v105, %v879
    %v881 = vlaneseq
    %v882 = vshrl.u32 %v881, 7
    %v883 = vsub.s32 7, %v882
    %v884 = vrot.slane %v105, %v883
    %v885 = vlaneseq
    %v886 = vshrl.u32 %v885, 7
    %v887 = vsub.s32 0, %v886
    %v888 = vrot.slane %v106, %v887
    %v889 = vlaneseq
    %v890 = vshrl.u32 %v889, 7
    %v891 = vsub.s32 1, %v890
    %v892 = vrot.slane %v106, %v891
    %v893 = vlaneseq
    %v894 = vshrl.u32 %v893, 7
    %v895 = vsub.s32 2, %v894
    %v896 = vrot.slane %v106, %v895
    %v897 = vlaneseq
    %v898 = vshrl.u32 %v897, 7
    %v899 = vsub.s32 3, %v898
    %v900 = vrot.slane %v106, %v899
    %v901 = vlaneseq
    %v902 = vshrl.u32 %v901, 7
    %v903 = vsub.s32 4, %v902
    %v904 = vrot.slane %v106, %v903
    %v905 = vlaneseq
    %v906 = vshrl.u32 %v905, 7
    %v907 = vsub.s32 5, %v906
    %v908 = vrot.slane %v106, %v907
    %v909 = vlaneseq
    %v910 = vshrl.u32 %v909, 7
    %v911 = vsub.s32 6, %v910
    %v912 = vrot.slane %v106, %v911
    %v913 = vlaneseq
    %v914 = vshrl.u32 %v913, 7
    %v915 = vsub.s32 7, %v914
    %v916 = vrot.slane %v106, %v915
    %v917 = vlaneseq
    %v918 = vshrl.u32 %v917, 7
    %v919 = vsub.s32 0, %v918
    %v920 = vrot.slane %v107, %v919
    %v921 = vlaneseq
    %v922 = vshrl.u32 %v921, 7
    %v923 = vsub.s32 1, %v922
    %v924 = vrot.slane %v107, %v923
    %v925 = vlaneseq
    %v926 = vshrl.u32 %v925, 7
    %v927 = vsub.s32 2, %v926
    %v928 = vrot.slane %v107, %v927
    %v929 = vlaneseq
    %v930 = vshrl.u32 %v929, 7
    %v931 = vsub.s32 3, %v930
    %v932 = vrot.slane %v107, %v931
    %v933 = vlaneseq
    %v934 = vshrl.u32 %v933, 7
    %v935 = vsub.s32 4, %v934
    %v936 = vrot.slane %v107, %v935
    %v937 = vlaneseq
    %v938 = vshrl.u32 %v937, 7
    %v939 = vsub.s32 5, %v938
    %v940 = vrot.slane %v107, %v939
    %v941 = vlaneseq
    %v942 = vshrl.u32 %v941, 7
    %v943 = vsub.s32 6, %v942
    %v944 = vrot.slane %v107, %v943
    %v945 = vlaneseq
    %v946 = vshrl.u32 %v945, 7
    %v947 = vsub.s32 7, %v946
    %v948 = vrot.slane %v107, %v947
    %v949 = vlaneseq
    %v950 = vshrl.u32 %v949, 7
    %v951 = vsub.s32 0, %v950
    %v952 = vrot.slane %v108, %v951
    %v953 = vlaneseq
    %v954 = vshrl.u32 %v953, 7
    %v955 = vsub.s32 1, %v954
    %v956 = vrot.slane %v108, %v955
    %v957 = vlaneseq
    %v958 = vshrl.u32 %v957, 7
    %v959 = vsub.s32 2, %v958
    %v960 = vrot.slane %v108, %v959
    %v961 = vlaneseq
    %v962 = vshrl.u32 %v961, 7
    %v963 = vsub.s32 3, %v962
    %v964 = vrot.slane %v108, %v963
    %v965 = vlaneseq
    %v966 = vshrl.u32 %v965, 7
    %v967 = vsub.s32 4, %v966
    %v968 = vrot.slane %v108, %v967
    %v969 = vlaneseq
    %v970 = vshrl.u32 %v969, 7
    %v971 = vsub.s32 5, %v970
    %v972 = vrot.slane %v108, %v971
    %v973 = vlaneseq
    %v974 = vshrl.u32 %v973, 7
    %v975 = vsub.s32 6, %v974
    %v976 = vrot.slane %v108, %v975
    %v977 = vlaneseq
    %v978 = vshrl.u32 %v977, 7
    %v979 = vsub.s32 7, %v978
    %v980 = vrot.slane %v108, %v979
    %v981 = vlaneseq
    %v982 = vshrl.u32 %v981, 7
    %v983 = vsub.s32 0, %v982
    %v984 = vrot.slane %v109, %v983
    %v985 = vlaneseq
    %v986 = vshrl.u32 %v985, 7
    %v987 = vsub.s32 1, %v986
    %v988 = vrot.slane %v109, %v987
    %v989 = vlaneseq
    %v990 = vshrl.u32 %v989, 7
    %v991 = vsub.s32 2, %v990
    %v992 = vrot.slane %v109, %v991
    %v993 = vlaneseq
    %v994 = vshrl.u32 %v993, 7
    %v995 = vsub.s32 3, %v994
    %v996 = vrot.slane %v109, %v995
    %v997 = vlaneseq
    %v998 = vshrl.u32 %v997, 7
    %v999 = vsub.s32 4, %v998
    %v1000 = vrot.slane %v109, %v999
    %v1001 = vlaneseq
    %v1002 = vshrl.u32 %v1001, 7
    %v1003 = vsub.s32 5, %v1002
    %v1004 = vrot.slane %v109, %v1003
    %v1005 = vlaneseq
    %v1006 = vshrl.u32 %v1005, 7
    %v1007 = vsub.s32 6, %v1006
    %v1008 = vrot.slane %v109, %v1007
    %v1009 = vlaneseq
    %v1010 = vshrl.u32 %v1009, 7
    %v1011 = vsub.s32 7, %v1010
    %v1012 = vrot.slane %v109, %v1011
    %v1013 = vlaneseq
    %v1014 = vshrl.u32 %v1013, 7
    %v1015 = vsub.s32 0, %v1014
    %v1016 = vrot.slane %v110, %v1015
    %v1017 = vlaneseq
    %v1018 = vshrl.u32 %v1017, 7
    %v1019 = vsub.s32 1, %v1018
    %v1020 = vrot.slane %v110, %v1019
    %v1021 = vlaneseq
    %v1022 = vshrl.u32 %v1021, 7
    %v1023 = vsub.s32 2, %v1022
    %v1024 = vrot.slane %v110, %v1023
    %v1025 = vlaneseq
    %v1026 = vshrl.u32 %v1025, 7
    %v1027 = vsub.s32 3, %v1026
    %v1028 = vrot.slane %v110, %v1027
    %v1029 = vlaneseq
    %v1030 = vshrl.u32 %v1029, 7
    %v1031 = vsub.s32 4, %v1030
    %v1032 = vrot.slane %v110, %v1031
    %v1033 = vlaneseq
    %v1034 = vshrl.u32 %v1033, 7
    %v1035 = vsub.s32 5, %v1034
    %v1036 = vrot.slane %v110, %v1035
    %v1037 = vlaneseq
    %v1038 = vshrl.u32 %v1037, 7
    %v1039 = vsub.s32 6, %v1038
    %v1040 = vrot.slane %v110, %v1039
    %v1041 = vlaneseq
    %v1042 = vshrl.u32 %v1041, 7
    %v1043 = vsub.s32 7, %v1042
    %v1044 = vrot.slane %v110, %v1043
    %v1045 = vlaneseq
    %v1046 = vshrl.u32 %v1045, 7
    %v1047 = vsub.s32 0, %v1046
    %v1048 = vrot.slane %v111, %v1047
    %v1049 = vlaneseq
    %v1050 = vshrl.u32 %v1049, 7
    %v1051 = vsub.s32 1, %v1050
    %v1052 = vrot.slane %v111, %v1051
    %v1053 = vlaneseq
    %v1054 = vshrl.u32 %v1053, 7
    %v1055 = vsub.s32 2, %v1054
    %v1056 = vrot.slane %v111, %v1055
    %v1057 = vlaneseq
    %v1058 = vshrl.u32 %v1057, 7
    %v1059 = vsub.s32 3, %v1058
    %v1060 = vrot.slane %v111, %v1059
    %v1061 = vlaneseq
    %v1062 = vshrl.u32 %v1061, 7
    %v1063 = vsub.s32 4, %v1062
    %v1064 = vrot.slane %v111, %v1063
    %v1065 = vlaneseq
    %v1066 = vshrl.u32 %v1065, 7
    %v1067 = vsub.s32 5, %v1066
    %v1068 = vrot.slane %v111, %v1067
    %v1069 = vlaneseq
    %v1070 = vshrl.u32 %v1069, 7
    %v1071 = vsub.s32 6, %v1070
    %v1072 = vrot.slane %v111, %v1071
    %v1073 = vlaneseq
    %v1074 = vshrl.u32 %v1073, 7
    %v1075 = vsub.s32 7, %v1074
    %v1076 = vrot.slane %v111, %v1075
    %v1077 = vlaneseq
    %v1078 = vshrl.u32 %v1077, 7
    %v1079 = vsub.s32 0, %v1078
    %v1080 = vrot.slane %v112, %v1079
    %v1081 = vlaneseq
    %v1082 = vshrl.u32 %v1081, 7
    %v1083 = vsub.s32 1, %v1082
    %v1084 = vrot.slane %v112, %v1083
    %v1085 = vlaneseq
    %v1086 = vshrl.u32 %v1085, 7
    %v1087 = vsub.s32 2, %v1086
    %v1088 = vrot.slane %v112, %v1087
    %v1089 = vlaneseq
    %v1090 = vshrl.u32 %v1089, 7
    %v1091 = vsub.s32 3, %v1090
    %v1092 = vrot.slane %v112, %v1091
    %v1093 = vlaneseq
    %v1094 = vshrl.u32 %v1093, 7
    %v1095 = vsub.s32 4, %v1094
    %v1096 = vrot.slane %v112, %v1095
    %v1097 = vlaneseq
    %v1098 = vshrl.u32 %v1097, 7
    %v1099 = vsub.s32 5, %v1098
    %v1100 = vrot.slane %v112, %v1099
    %v1101 = vlaneseq
    %v1102 = vshrl.u32 %v1101, 7
    %v1103 = vsub.s32 6, %v1102
    %v1104 = vrot.slane %v112, %v1103
    %v1105 = vlaneseq
    %v1106 = vshrl.u32 %v1105, 7
    %v1107 = vsub.s32 7, %v1106
    %v1108 = vrot.slane %v112, %v1107
    %v1109 = vlaneseq
    %v1110 = vshrl.u32 %v1109, 7
    %v1111 = vsub.s32 0, %v1110
    %v1112 = vrot.slane %v113, %v1111
    %v1113 = vlaneseq
    %v1114 = vshrl.u32 %v1113, 7
    %v1115 = vsub.s32 1, %v1114
    %v1116 = vrot.slane %v113, %v1115
    %v1117 = vlaneseq
    %v1118 = vshrl.u32 %v1117, 7
    %v1119 = vsub.s32 2, %v1118
    %v1120 = vrot.slane %v113, %v1119
    %v1121 = vlaneseq
    %v1122 = vshrl.u32 %v1121, 7
    %v1123 = vsub.s32 3, %v1122
    %v1124 = vrot.slane %v113, %v1123
    %v1125 = vlaneseq
    %v1126 = vshrl.u32 %v1125, 7
    %v1127 = vsub.s32 4, %v1126
    %v1128 = vrot.slane %v113, %v1127
    %v1129 = vlaneseq
    %v1130 = vshrl.u32 %v1129, 7
    %v1131 = vsub.s32 5, %v1130
    %v1132 = vrot.slane %v113, %v1131
    %v1133 = vlaneseq
    %v1134 = vshrl.u32 %v1133, 7
    %v1135 = vsub.s32 6, %v1134
    %v1136 = vrot.slane %v113, %v1135
    %v1137 = vlaneseq
    %v1138 = vshrl.u32 %v1137, 7
    %v1139 = vsub.s32 7, %v1138
    %v1140 = vrot.slane %v113, %v1139
    %v1141 = vlaneseq
    %v1142 = vshrl.u32 %v1141, 7
    %v1143 = vsub.s32 0, %v1142
    %v1144 = vrot.slane %v114, %v1143
    %v1145 = vlaneseq
    %v1146 = vshrl.u32 %v1145, 7
    %v1147 = vsub.s32 1, %v1146
    %v1148 = vrot.slane %v114, %v1147
    %v1149 = vlaneseq
    %v1150 = vshrl.u32 %v1149, 7
    %v1151 = vsub.s32 2, %v1150
    %v1152 = vrot.slane %v114, %v1151
    %v1153 = vlaneseq
    %v1154 = vshrl.u32 %v1153, 7
    %v1155 = vsub.s32 3, %v1154
    %v1156 = vrot.slane %v114, %v1155
    %v1157 = vlaneseq
    %v1158 = vshrl.u32 %v1157, 7
    %v1159 = vsub.s32 4, %v1158
    %v1160 = vrot.slane %v114, %v1159
    %v1161 = vlaneseq
    %v1162 = vshrl.u32 %v1161, 7
    %v1163 = vsub.s32 5, %v1162
    %v1164 = vrot.slane %v114, %v1163
    %v1165 = vlaneseq
    %v1166 = vshrl.u32 %v1165, 7
    %v1167 = vsub.s32 6, %v1166
    %v1168 = vrot.slane %v114, %v1167
    %v1169 = vlaneseq
    %v1170 = vshrl.u32 %v1169, 7
    %v1171 = vsub.s32 7, %v1170
    %v1172 = vrot.slane %v114, %v1171
    %v1173 = vlaneseq
    %v1174 = vshrl.u32 %v1173, 7
    %v1175 = vsub.s32 0, %v1174
    %v1176 = vrot.slane %v115, %v1175
    %v1177 = vlaneseq
    %v1178 = vshrl.u32 %v1177, 7
    %v1179 = vsub.s32 1, %v1178
    %v1180 = vrot.slane %v115, %v1179
    %v1181 = vlaneseq
    %v1182 = vshrl.u32 %v1181, 7
    %v1183 = vsub.s32 2, %v1182
    %v1184 = vrot.slane %v115, %v1183
    %v1185 = vlaneseq
    %v1186 = vshrl.u32 %v1185, 7
    %v1187 = vsub.s32 3, %v1186
    %v1188 = vrot.slane %v115, %v1187
    %v1189 = vlaneseq
    %v1190 = vshrl.u32 %v1189, 7
    %v1191 = vsub.s32 4, %v1190
    %v1192 = vrot.slane %v115, %v1191
    %v1193 = vlaneseq
    %v1194 = vshrl.u32 %v1193, 7
    %v1195 = vsub.s32 5, %v1194
    %v1196 = vrot.slane %v115, %v1195
    %v1197 = vlaneseq
    %v1198 = vshrl.u32 %v1197, 7
    %v1199 = vsub.s32 6, %v1198
    %v1200 = vrot.slane %v115, %v1199
    %v1201 = vlaneseq
    %v1202 = vshrl.u32 %v1201, 7
    %v1203 = vsub.s32 7, %v1202
    %v1204 = vrot.slane %v115, %v1203
    %v1205 = vlaneseq
    %v1206 = vshrl.u32 %v1205, 7
    %v1207 = vsub.s32 0, %v1206
    %v1208 = vrot.slane %v116, %v1207
    %v1209 = vlaneseq
    %v1210 = vshrl.u32 %v1209, 7
    %v1211 = vsub.s32 1, %v1210
    %v1212 = vrot.slane %v116, %v1211
    %v1213 = vlaneseq
    %v1214 = vshrl.u32 %v1213, 7
    %v1215 = vsub.s32 2, %v1214
    %v1216 = vrot.slane %v116, %v1215
    %v1217 = vlaneseq
    %v1218 = vshrl.u32 %v1217, 7
    %v1219 = vsub.s32 3, %v1218
    %v1220 = vrot.slane %v116, %v1219
    %v1221 = vlaneseq
    %v1222 = vshrl.u32 %v1221, 7
    %v1223 = vsub.s32 4, %v1222
    %v1224 = vrot.slane %v116, %v1223
    %v1225 = vlaneseq
    %v1226 = vshrl.u32 %v1225, 7
    %v1227 = vsub.s32 5, %v1226
    %v1228 = vrot.slane %v116, %v1227
    %v1229 = vlaneseq
    %v1230 = vshrl.u32 %v1229, 7
    %v1231 = vsub.s32 6, %v1230
    %v1232 = vrot.slane %v116, %v1231
    %v1233 = vlaneseq
    %v1234 = vshrl.u32 %v1233, 7
    %v1235 = vsub.s32 7, %v1234
    %v1236 = vrot.slane %v116, %v1235
    %v1237 = vlaneseq
    %v1238 = vshrl.u32 %v1237, 7
    %v1239 = vsub.s32 0, %v1238
    %v1240 = vrot.slane %v117, %v1239
    %v1241 = vlaneseq
    %v1242 = vshrl.u32 %v1241, 7
    %v1243 = vsub.s32 1, %v1242
    %v1244 = vrot.slane %v117, %v1243
    %v1245 = vlaneseq
    %v1246 = vshrl.u32 %v1245, 7
    %v1247 = vsub.s32 2, %v1246
    %v1248 = vrot.slane %v117, %v1247
    %v1249 = vlaneseq
    %v1250 = vshrl.u32 %v1249, 7
    %v1251 = vsub.s32 3, %v1250
    %v1252 = vrot.slane %v117, %v1251
    %v1253 = vlaneseq
    %v1254 = vshrl.u32 %v1253, 7
    %v1255 = vsub.s32 4, %v1254
    %v1256 = vrot.slane %v117, %v1255
    %v1257 = vlaneseq
    %v1258 = vshrl.u32 %v1257, 7
    %v1259 = vsub.s32 5, %v1258
    %v1260 = vrot.slane %v117, %v1259
    %v1261 = vlaneseq
    %v1262 = vshrl.u32 %v1261, 7
    %v1263 = vsub.s32 6, %v1262
    %v1264 = vrot.slane %v117, %v1263
    %v1265 = vlaneseq
    %v1266 = vshrl.u32 %v1265, 7
    %v1267 = vsub.s32 7, %v1266
    %v1268 = vrot.slane %v117, %v1267
    %v1269 = vlaneseq
    %v1270 = vshrl.u32 %v1269, 7
    %v1271 = vsub.s32 0, %v1270
    %v1272 = vrot.slane %v118, %v1271
    %v1273 = vlaneseq
    %v1274 = vshrl.u32 %v1273, 7
    %v1275 = vsub.s32 1, %v1274
    %v1276 = vrot.slane %v118, %v1275
    %v1277 = vlaneseq
    %v1278 = vshrl.u32 %v1277, 7
    %v1279 = vsub.s32 2, %v1278
    %v1280 = vrot.slane %v118, %v1279
    %v1281 = vlaneseq
    %v1282 = vshrl.u32 %v1281, 7
    %v1283 = vsub.s32 3, %v1282
    %v1284 = vrot.slane %v118, %v1283
    %v1285 = vlaneseq
    %v1286 = vshrl.u32 %v1285, 7
    %v1287 = vsub.s32 4, %v1286
    %v1288 = vrot.slane %v118, %v1287
    %v1289 = vlaneseq
    %v1290 = vshrl.u32 %v1289, 7
    %v1291 = vsub.s32 5, %v1290
    %v1292 = vrot.slane %v118, %v1291
    %v1293 = vlaneseq
    %v1294 = vshrl.u32 %v1293, 7
    %v1295 = vsub.s32 6, %v1294
    %v1296 = vrot.slane %v118, %v1295
    %v1297 = vlaneseq
    %v1298 = vshrl.u32 %v1297, 7
    %v1299 = vsub.s32 7, %v1298
    %v1300 = vrot.slane %v118, %v1299
    %v1301 = vlaneseq
    %v1302 = vshrl.u32 %v1301, 7
    %v1303 = vsub.s32 0, %v1302
    %v1304 = vrot.slane %v119, %v1303
    %v1305 = vlaneseq
    %v1306 = vshrl.u32 %v1305, 7
    %v1307 = vsub.s32 1, %v1306
    %v1308 = vrot.slane %v119, %v1307
    %v1309 = vlaneseq
    %v1310 = vshrl.u32 %v1309, 7
    %v1311 = vsub.s32 2, %v1310
    %v1312 = vrot.slane %v119, %v1311
    %v1313 = vlaneseq
    %v1314 = vshrl.u32 %v1313, 7
    %v1315 = vsub.s32 3, %v1314
    %v1316 = vrot.slane %v119, %v1315
    %v1317 = vlaneseq
    %v1318 = vshrl.u32 %v1317, 7
    %v1319 = vsub.s32 4, %v1318
    %v1320 = vrot.slane %v119, %v1319
    %v1321 = vlaneseq
    %v1322 = vshrl.u32 %v1321, 7
    %v1323 = vsub.s32 5, %v1322
    %v1324 = vrot.slane %v119, %v1323
    %v1325 = vlaneseq
    %v1326 = vshrl.u32 %v1325, 7
    %v1327 = vsub.s32 6, %v1326
    %v1328 = vrot.slane %v119, %v1327
    %v1329 = vlaneseq
    %v1330 = vshrl.u32 %v1329, 7
    %v1331 = vsub.s32 7, %v1330
    %v1332 = vrot.slane %v119, %v1331
    %v1333 = vlaneseq
    %v1334 = vshrl.u32 %v1333, 7
    %v1335 = vsub.s32 0, %v1334
    %v1336 = vrot.slane %v120, %v1335
    %v1337 = vlaneseq
    %v1338 = vshrl.u32 %v1337, 7
    %v1339 = vsub.s32 1, %v1338
    %v1340 = vrot.slane %v120, %v1339
    %v1341 = vlaneseq
    %v1342 = vshrl.u32 %v1341, 7
    %v1343 = vsub.s32 2, %v1342
    %v1344 = vrot.slane %v120, %v1343
    %v1345 = vlaneseq
    %v1346 = vshrl.u32 %v1345, 7
    %v1347 = vsub.s32 3, %v1346
    %v1348 = vrot.slane %v120, %v1347
    %v1349 = vlaneseq
    %v1350 = vshrl.u32 %v1349, 7
    %v1351 = vsub.s32 4, %v1350
    %v1352 = vrot.slane %v120, %v1351
    %v1353 = vlaneseq
    %v1354 = vshrl.u32 %v1353, 7
    %v1355 = vsub.s32 5, %v1354
    %v1356 = vrot.slane %v120, %v1355
    %v1357 = vlaneseq
    %v1358 = vshrl.u32 %v1357, 7
    %v1359 = vsub.s32 6, %v1358
    %v1360 = vrot.slane %v120, %v1359
    %v1361 = vlaneseq
    %v1362 = vshrl.u32 %v1361, 7
    %v1363 = vsub.s32 7, %v1362
    %v1364 = vrot.slane %v120, %v1363
    %v1365 = vlaneseq
    %v1366 = vshrl.u32 %v1365, 7
    %v1367 = vsub.s32 0, %v1366
    %v1368 = vrot.slane %v121, %v1367
    %v1369 = vlaneseq
    %v1370 = vshrl.u32 %v1369, 7
    %v1371 = vsub.s32 1, %v1370
    %v1372 = vrot.slane %v121, %v1371
    %v1373 = vlaneseq
    %v1374 = vshrl.u32 %v1373, 7
    %v1375 = vsub.s32 2, %v1374
    %v1376 = vrot.slane %v121, %v1375
    %v1377 = vlaneseq
    %v1378 = vshrl.u32 %v1377, 7
    %v1379 = vsub.s32 3, %v1378
    %v1380 = vrot.slane %v121, %v1379
    %v1381 = vlaneseq
    %v1382 = vshrl.u32 %v1381, 7
    %v1383 = vsub.s32 4, %v1382
    %v1384 = vrot.slane %v121, %v1383
    %v1385 = vlaneseq
    %v1386 = vshrl.u32 %v1385, 7
    %v1387 = vsub.s32 5, %v1386
    %v1388 = vrot.slane %v121, %v1387
    %v1389 = vlaneseq
    %v1390 = vshrl.u32 %v1389, 7
    %v1391 = vsub.s32 6, %v1390
    %v1392 = vrot.slane %v121, %v1391
    %v1393 = vlaneseq
    %v1394 = vshrl.u32 %v1393, 7
    %v1395 = vsub.s32 7, %v1394
    %v1396 = vrot.slane %v121, %v1395
    %v1397 = vlaneseq
    %v1398 = vshrl.u32 %v1397, 7
    %v1399 = vsub.s32 0, %v1398
    %v1400 = vrot.slane %v122, %v1399
    %v1401 = vlaneseq
    %v1402 = vshrl.u32 %v1401, 7
    %v1403 = vsub.s32 1, %v1402
    %v1404 = vrot.slane %v122, %v1403
    %v1405 = vlaneseq
    %v1406 = vshrl.u32 %v1405, 7
    %v1407 = vsub.s32 2, %v1406
    %v1408 = vrot.slane %v122, %v1407
    %v1409 = vlaneseq
    %v1410 = vshrl.u32 %v1409, 7
    %v1411 = vsub.s32 3, %v1410
    %v1412 = vrot.slane %v122, %v1411
    %v1413 = vlaneseq
    %v1414 = vshrl.u32 %v1413, 7
    %v1415 = vsub.s32 4, %v1414
    %v1416 = vrot.slane %v122, %v1415
    %v1417 = vlaneseq
    %v1418 = vshrl.u32 %v1417, 7
    %v1419 = vsub.s32 5, %v1418
    %v1420 = vrot.slane %v122, %v1419
    %v1421 = vlaneseq
    %v1422 = vshrl.u32 %v1421, 7
    %v1423 = vsub.s32 6, %v1422
    %v1424 = vrot.slane %v122, %v1423
    %v1425 = vlaneseq
    %v1426 = vshrl.u32 %v1425, 7
    %v1427 = vsub.s32 7, %v1426
    %v1428 = vrot.slane %v122, %v1427
    %v1429 = vlaneseq
    %v1430 = vshrl.u32 %v1429, 7
    %v1431 = vsub.s32 0, %v1430
    %v1432 = vrot.slane %v123, %v1431
    %v1433 = vlaneseq
    %v1434 = vshrl.u32 %v1433, 7
    %v1435 = vsub.s32 1, %v1434
    %v1436 = vrot.slane %v123, %v1435
    %v1437 = vlaneseq
    %v1438 = vshrl.u32 %v1437, 7
    %v1439 = vsub.s32 2, %v1438
    %v1440 = vrot.slane %v123, %v1439
    %v1441 = vlaneseq
    %v1442 = vshrl.u32 %v1441, 7
    %v1443 = vsub.s32 3, %v1442
    %v1444 = vrot.slane %v123, %v1443
    %v1445 = vlaneseq
    %v1446 = vshrl.u32 %v1445, 7
    %v1447 = vsub.s32 4, %v1446
    %v1448 = vrot.slane %v123, %v1447
    %v1449 = vlaneseq
    %v1450 = vshrl.u32 %v1449, 7
    %v1451 = vsub.s32 5, %v1450
    %v1452 = vrot.slane %v123, %v1451
    %v1453 = vlaneseq
    %v1454 = vshrl.u32 %v1453, 7
    %v1455 = vsub.s32 6, %v1454
    %v1456 = vrot.slane %v123, %v1455
    %v1457 = vlaneseq
    %v1458 = vshrl.u32 %v1457, 7
    %v1459 = vsub.s32 7, %v1458
    %v1460 = vrot.slane %v123, %v1459
    %v1461 = vlaneseq
    %v1462 = vshrl.u32 %v1461, 7
    %v1463 = vsub.s32 0, %v1462
    %v1464 = vrot.slane %v124, %v1463
    %v1465 = vlaneseq
    %v1466 = vshrl.u32 %v1465, 7
    %v1467 = vsub.s32 1, %v1466
    %v1468 = vrot.slane %v124, %v1467
    %v1469 = vlaneseq
    %v1470 = vshrl.u32 %v1469, 7
    %v1471 = vsub.s32 2, %v1470
    %v1472 = vrot.slane %v124, %v1471
    %v1473 = vlaneseq
    %v1474 = vshrl.u32 %v1473, 7
    %v1475 = vsub.s32 3, %v1474
    %v1476 = vrot.slane %v124, %v1475
    %v1477 = vlaneseq
    %v1478 = vshrl.u32 %v1477, 7
    %v1479 = vsub.s32 4, %v1478
    %v1480 = vrot.slane %v124, %v1479
    %v1481 = vlaneseq
    %v1482 = vshrl.u32 %v1481, 7
    %v1483 = vsub.s32 5, %v1482
    %v1484 = vrot.slane %v124, %v1483
    %v1485 = vlaneseq
    %v1486 = vshrl.u32 %v1485, 7
    %v1487 = vsub.s32 6, %v1486
    %v1488 = vrot.slane %v124, %v1487
    %v1489 = vlaneseq
    %v1490 = vshrl.u32 %v1489, 7
    %v1491 = vsub.s32 7, %v1490
    %v1492 = vrot.slane %v124, %v1491
    %v1493 = vlaneseq
    %v1494 = vshrl.u32 %v1493, 7
    %v1495 = vsub.s32 0, %v1494
    %v1496 = vrot.slane %v125, %v1495
    %v1497 = vlaneseq
    %v1498 = vshrl.u32 %v1497, 7
    %v1499 = vsub.s32 1, %v1498
    %v1500 = vrot.slane %v125, %v1499
    %v1501 = vlaneseq
    %v1502 = vshrl.u32 %v1501, 7
    %v1503 = vsub.s32 2, %v1502
    %v1504 = vrot.slane %v125, %v1503
    %v1505 = vlaneseq
    %v1506 = vshrl.u32 %v1505, 7
    %v1507 = vsub.s32 3, %v1506
    %v1508 = vrot.slane %v125, %v1507
    %v1509 = vlaneseq
    %v1510 = vshrl.u32 %v1509, 7
    %v1511 = vsub.s32 4, %v1510
    %v1512 = vrot.slane %v125, %v1511
    %v1513 = vlaneseq
    %v1514 = vshrl.u32 %v1513, 7
    %v1515 = vsub.s32 5, %v1514
    %v1516 = vrot.slane %v125, %v1515
    %v1517 = vlaneseq
    %v1518 = vshrl.u32 %v1517, 7
    %v1519 = vsub.s32 6, %v1518
    %v1520 = vrot.slane %v125, %v1519
    %v1521 = vlaneseq
    %v1522 = vshrl.u32 %v1521, 7
    %v1523 = vsub.s32 7, %v1522
    %v1524 = vrot.slane %v125, %v1523
    %v1525 = vlaneseq
    %v1526 = vshrl.u32 %v1525, 7
    %v1527 = vsub.s32 0, %v1526
    %v1528 = vrot.slane %v126, %v1527
    %v1529 = vlaneseq
    %v1530 = vshrl.u32 %v1529, 7
    %v1531 = vsub.s32 1, %v1530
    %v1532 = vrot.slane %v126, %v1531
    %v1533 = vlaneseq
    %v1534 = vshrl.u32 %v1533, 7
    %v1535 = vsub.s32 2, %v1534
    %v1536 = vrot.slane %v126, %v1535
    %v1537 = vlaneseq
    %v1538 = vshrl.u32 %v1537, 7
    %v1539 = vsub.s32 3, %v1538
    %v1540 = vrot.slane %v126, %v1539
    %v1541 = vlaneseq
    %v1542 = vshrl.u32 %v1541, 7
    %v1543 = vsub.s32 4, %v1542
    %v1544 = vrot.slane %v126, %v1543
    %v1545 = vlaneseq
    %v1546 = vshrl.u32 %v1545, 7
    %v1547 = vsub.s32 5, %v1546
    %v1548 = vrot.slane %v126, %v1547
    %v1549 = vlaneseq
    %v1550 = vshrl.u32 %v1549, 7
    %v1551 = vsub.s32 6, %v1550
    %v1552 = vrot.slane %v126, %v1551
    %v1553 = vlaneseq
    %v1554 = vshrl.u32 %v1553, 7
    %v1555 = vsub.s32 7, %v1554
    %v1556 = vrot.slane %v126, %v1555
    %v1557 = vlaneseq
    %v1558 = vshrl.u32 %v1557, 7
    %v1559 = vsub.s32 0, %v1558
    %v1560 = vrot.slane %v127, %v1559
    %v1561 = vlaneseq
    %v1562 = vshrl.u32 %v1561, 7
    %v1563 = vsub.s32 1, %v1562
    %v1564 = vrot.slane %v127, %v1563
    %v1565 = vlaneseq
    %v1566 = vshrl.u32 %v1565, 7
    %v1567 = vsub.s32 2, %v1566
    %v1568 = vrot.slane %v127, %v1567
    %v1569 = vlaneseq
    %v1570 = vshrl.u32 %v1569, 7
    %v1571 = vsub.s32 3, %v1570
    %v1572 = vrot.slane %v127, %v1571
    %v1573 = vlaneseq
    %v1574 = vshrl.u32 %v1573, 7
    %v1575 = vsub.s32 4, %v1574
    %v1576 = vrot.slane %v127, %v1575
    %v1577 = vlaneseq
    %v1578 = vshrl.u32 %v1577, 7
    %v1579 = vsub.s32 5, %v1578
    %v1580 = vrot.slane %v127, %v1579
    %v1581 = vlaneseq
    %v1582 = vshrl.u32 %v1581, 7
    %v1583 = vsub.s32 6, %v1582
    %v1584 = vrot.slane %v127, %v1583
    %v1585 = vlaneseq
    %v1586 = vshrl.u32 %v1585, 7
    %v1587 = vsub.s32 7, %v1586
    %v1588 = vrot.slane %v127, %v1587
    %v1589 = vlaneseq
    %v1590 = vshrl.u32 %v1589, 7
    %v1591 = vsub.s32 0, %v1590
    %v1592 = vrot.slane %v128, %v1591
    %v1593 = vlaneseq
    %v1594 = vshrl.u32 %v1593, 7
    %v1595 = vsub.s32 1, %v1594
    %v1596 = vrot.slane %v128, %v1595
    %v1597 = vlaneseq
    %v1598 = vshrl.u32 %v1597, 7
    %v1599 = vsub.s32 2, %v1598
    %v1600 = vrot.slane %v128, %v1599
    %v1601 = vlaneseq
    %v1602 = vshrl.u32 %v1601, 7
    %v1603 = vsub.s32 3, %v1602
    %v1604 = vrot.slane %v128, %v1603
    %v1605 = vlaneseq
    %v1606 = vshrl.u32 %v1605, 7
    %v1607 = vsub.s32 4, %v1606
    %v1608 = vrot.slane %v128, %v1607
    %v1609 = vlaneseq
    %v1610 = vshrl.u32 %v1609, 7
    %v1611 = vsub.s32 5, %v1610
    %v1612 = vrot.slane %v128, %v1611
    %v1613 = vlaneseq
    %v1614 = vshrl.u32 %v1613, 7
    %v1615 = vsub.s32 6, %v1614
    %v1616 = vrot.slane %v128, %v1615
    %v1617 = vlaneseq
    %v1618 = vshrl.u32 %v1617, 7
    %v1619 = vsub.s32 7, %v1618
    %v1620 = vrot.slane %v128, %v1619
    %v1621 = vlaneseq
    %v1622 = vshrl.u32 %v1621, 7
    %v1623 = vsub.s32 0, %v1622
    %v1624 = vrot.slane %v129, %v1623
    %v1625 = vlaneseq
    %v1626 = vshrl.u32 %v1625, 7
    %v1627 = vsub.s32 1, %v1626
    %v1628 = vrot.slane %v129, %v1627
    %v1629 = vlaneseq
    %v1630 = vshrl.u32 %v1629, 7
    %v1631 = vsub.s32 2, %v1630
    %v1632 = vrot.slane %v129, %v1631
    %v1633 = vlaneseq
    %v1634 = vshrl.u32 %v1633, 7
    %v1635 = vsub.s32 3, %v1634
    %v1636 = vrot.slane %v129, %v1635
    %v1637 = vlaneseq
    %v1638 = vshrl.u32 %v1637, 7
    %v1639 = vsub.s32 4, %v1638
    %v1640 = vrot.slane %v129, %v1639
    %v1641 = vlaneseq
    %v1642 = vshrl.u32 %v1641, 7
    %v1643 = vsub.s32 5, %v1642
    %v1644 = vrot.slane %v129, %v1643
    %v1645 = vlaneseq
    %v1646 = vshrl.u32 %v1645, 7
    %v1647 = vsub.s32 6, %v1646
    %v1648 = vrot.slane %v129, %v1647
    %v1649 = vlaneseq
    %v1650 = vshrl.u32 %v1649, 7
    %v1651 = vsub.s32 7, %v1650
    %v1652 = vrot.slane %v129, %v1651
    %v1653 = vlaneseq
    %v1654 = vshrl.u32 %v1653, 7
    %v1655 = vsub.s32 0, %v1654
    %v1656 = vrot.slane %v130, %v1655
    %v1657 = vlaneseq
    %v1658 = vshrl.u32 %v1657, 7
    %v1659 = vsub.s32 1, %v1658
    %v1660 = vrot.slane %v130, %v1659
    %v1661 = vlaneseq
    %v1662 = vshrl.u32 %v1661, 7
    %v1663 = vsub.s32 2, %v1662
    %v1664 = vrot.slane %v130, %v1663
    %v1665 = vlaneseq
    %v1666 = vshrl.u32 %v1665, 7
    %v1667 = vsub.s32 3, %v1666
    %v1668 = vrot.slane %v130, %v1667
    %v1669 = vlaneseq
    %v1670 = vshrl.u32 %v1669, 7
    %v1671 = vsub.s32 4, %v1670
    %v1672 = vrot.slane %v130, %v1671
    %v1673 = vlaneseq
    %v1674 = vshrl.u32 %v1673, 7
    %v1675 = vsub.s32 5, %v1674
    %v1676 = vrot.slane %v130, %v1675
    %v1677 = vlaneseq
    %v1678 = vshrl.u32 %v1677, 7
    %v1679 = vsub.s32 6, %v1678
    %v1680 = vrot.slane %v130, %v1679
    %v1681 = vlaneseq
    %v1682 = vshrl.u32 %v1681, 7
    %v1683 = vsub.s32 7, %v1682
    %v1684 = vrot.slane %v130, %v1683
    %v1685 = vlaneseq
    %v1686 = vshrl.u32 %v1685, 7
    %v1687 = vsub.s32 0, %v1686
    %v1688 = vrot.slane %v131, %v1687
    %v1689 = vlaneseq
    %v1690 = vshrl.u32 %v1689, 7
    %v1691 = vsub.s32 1, %v1690
    %v1692 = vrot.slane %v131, %v1691
    %v1693 = vlaneseq
    %v1694 = vshrl.u32 %v1693, 7
    %v1695 = vsub.s32 2, %v1694
    %v1696 = vrot.slane %v131, %v1695
    %v1697 = vlaneseq
    %v1698 = vshrl.u32 %v1697, 7
    %v1699 = vsub.s32 3, %v1698
    %v1700 = vrot.slane %v131, %v1699
    %v1701 = vlaneseq
    %v1702 = vshrl.u32 %v1701, 7
    %v1703 = vsub.s32 4, %v1702
    %v1704 = vrot.slane %v131, %v1703
    %v1705 = vlaneseq
    %v1706 = vshrl.u32 %v1705, 7
    %v1707 = vsub.s32 5, %v1706
    %v1708 = vrot.slane %v131, %v1707
    %v1709 = vlaneseq
    %v1710 = vshrl.u32 %v1709, 7
    %v1711 = vsub.s32 6, %v1710
    %v1712 = vrot.slane %v131, %v1711
    %v1713 = vlaneseq
    %v1714 = vshrl.u32 %v1713, 7
    %v1715 = vsub.s32 7, %v1714
    %v1716 = vrot.slane %v131, %v1715
    %v1717 = vlaneseq
    %v1718 = vshrl.u32 %v1717, 7
    %v1719 = vsub.s32 0, %v1718
    %v1720 = vrot.slane %v132, %v1719
    %v1721 = vlaneseq
    %v1722 = vshrl.u32 %v1721, 7
    %v1723 = vsub.s32 1, %v1722
    %v1724 = vrot.slane %v132, %v1723
    %v1725 = vlaneseq
    %v1726 = vshrl.u32 %v1725, 7
    %v1727 = vsub.s32 2, %v1726
    %v1728 = vrot.slane %v132, %v1727
    %v1729 = vlaneseq
    %v1730 = vshrl.u32 %v1729, 7
    %v1731 = vsub.s32 3, %v1730
    %v1732 = vrot.slane %v132, %v1731
    %v1733 = vlaneseq
    %v1734 = vshrl.u32 %v1733, 7
    %v1735 = vsub.s32 4, %v1734
    %v1736 = vrot.slane %v132, %v1735
    %v1737 = vlaneseq
    %v1738 = vshrl.u32 %v1737, 7
    %v1739 = vsub.s32 5, %v1738
    %v1740 = vrot.slane %v132, %v1739
    %v1741 = vlaneseq
    %v1742 = vshrl.u32 %v1741, 7
    %v1743 = vsub.s32 6, %v1742
    %v1744 = vrot.slane %v132, %v1743
    %v1745 = vlaneseq
    %v1746 = vshrl.u32 %v1745, 7
    %v1747 = vsub.s32 7, %v1746
    %v1748 = vrot.slane %v132, %v1747
    %v1749 = vlaneseq
    %v1750 = vshrl.u32 %v1749, 7
    %v1751 = vsub.s32 0, %v1750
    %v1752 = vrot.slane %v133, %v1751
    %v1753 = vlaneseq
    %v1754 = vshrl.u32 %v1753, 7
    %v1755 = vsub.s32 1, %v1754
    %v1756 = vrot.slane %v133, %v1755
    %v1757 = vlaneseq
    %v1758 = vshrl.u32 %v1757, 7
    %v1759 = vsub.s32 2, %v1758
    %v1760 = vrot.slane %v133, %v1759
    %v1761 = vlaneseq
    %v1762 = vshrl.u32 %v1761, 7
    %v1763 = vsub.s32 3, %v1762
    %v1764 = vrot.slane %v133, %v1763
    %v1765 = vlaneseq
    %v1766 = vshrl.u32 %v1765, 7
    %v1767 = vsub.s32 4, %v1766
    %v1768 = vrot.slane %v133, %v1767
    %v1769 = vlaneseq
    %v1770 = vshrl.u32 %v1769, 7
    %v1771 = vsub.s32 5, %v1770
    %v1772 = vrot.slane %v133, %v1771
    %v1773 = vlaneseq
    %v1774 = vshrl.u32 %v1773, 7
    %v1775 = vsub.s32 6, %v1774
    %v1776 = vrot.slane %v133, %v1775
    %v1777 = vlaneseq
    %v1778 = vshrl.u32 %v1777, 7
    %v1779 = vsub.s32 7, %v1778
    %v1780 = vrot.slane %v133, %v1779
    %v1781 = vlaneseq
    %v1782 = vshrl.u32 %v1781, 7
    %v1783 = vsub.s32 0, %v1782
    %v1784 = vrot.slane %v134, %v1783
    %v1785 = vlaneseq
    %v1786 = vshrl.u32 %v1785, 7
    %v1787 = vsub.s32 1, %v1786
    %v1788 = vrot.slane %v134, %v1787
    %v1789 = vlaneseq
    %v1790 = vshrl.u32 %v1789, 7
    %v1791 = vsub.s32 2, %v1790
    %v1792 = vrot.slane %v134, %v1791
    %v1793 = vlaneseq
    %v1794 = vshrl.u32 %v1793, 7
    %v1795 = vsub.s32 3, %v1794
    %v1796 = vrot.slane %v134, %v1795
    %v1797 = vlaneseq
    %v1798 = vshrl.u32 %v1797, 7
    %v1799 = vsub.s32 4, %v1798
    %v1800 = vrot.slane %v134, %v1799
    %v1801 = vlaneseq
    %v1802 = vshrl.u32 %v1801, 7
    %v1803 = vsub.s32 5, %v1802
    %v1804 = vrot.slane %v134, %v1803
    %v1805 = vlaneseq
    %v1806 = vshrl.u32 %v1805, 7
    %v1807 = vsub.s32 6, %v1806
    %v1808 = vrot.slane %v134, %v1807
    %v1809 = vlaneseq
    %v1810 = vshrl.u32 %v1809, 7
    %v1811 = vsub.s32 7, %v1810
    %v1812 = vrot.slane %v134, %v1811
    %v1813 = vlaneseq
    %v1814 = vshrl.u32 %v1813, 7
    %v1815 = vsub.s32 0, %v1814
    %v1816 = vrot.slane %v135, %v1815
    %v1817 = vlaneseq
    %v1818 = vshrl.u32 %v1817, 7
    %v1819 = vsub.s32 1, %v1818
    %v1820 = vrot.slane %v135, %v1819
    %v1821 = vlaneseq
    %v1822 = vshrl.u32 %v1821, 7
    %v1823 = vsub.s32 2, %v1822
    %v1824 = vrot.slane %v135, %v1823
    %v1825 = vlaneseq
    %v1826 = vshrl.u32 %v1825, 7
    %v1827 = vsub.s32 3, %v1826
    %v1828 = vrot.slane %v135, %v1827
    %v1829 = vlaneseq
    %v1830 = vshrl.u32 %v1829, 7
    %v1831 = vsub.s32 4, %v1830
    %v1832 = vrot.slane %v135, %v1831
    %v1833 = vlaneseq
    %v1834 = vshrl.u32 %v1833, 7
    %v1835 = vsub.s32 5, %v1834
    %v1836 = vrot.slane %v135, %v1835
    %v1837 = vlaneseq
    %v1838 = vshrl.u32 %v1837, 7
    %v1839 = vsub.s32 6, %v1838
    %v1840 = vrot.slane %v135, %v1839
    %v1841 = vlaneseq
    %v1842 = vshrl.u32 %v1841, 7
    %v1843 = vsub.s32 7, %v1842
    %v1844 = vrot.slane %v135, %v1843
    %v1845 = vlaneseq
    %v1846 = vshrl.u32 %v1845, 7
    %v1847 = vsub.s32 0, %v1846
    %v1848 = vrot.slane %v136, %v1847
    %v1849 = vlaneseq
    %v1850 = vshrl.u32 %v1849, 7
    %v1851 = vsub.s32 1, %v1850
    %v1852 = vrot.slane %v136, %v1851
    %v1853 = vlaneseq
    %v1854 = vshrl.u32 %v1853, 7
    %v1855 = vsub.s32 2, %v1854
    %v1856 = vrot.slane %v136, %v1855
    %v1857 = vlaneseq
    %v1858 = vshrl.u32 %v1857, 7
    %v1859 = vsub.s32 3, %v1858
    %v1860 = vrot.slane %v136, %v1859
    %v1861 = vlaneseq
    %v1862 = vshrl.u32 %v1861, 7
    %v1863 = vsub.s32 4, %v1862
    %v1864 = vrot.slane %v136, %v1863
    %v1865 = vlaneseq
    %v1866 = vshrl.u32 %v1865, 7
    %v1867 = vsub.s32 5, %v1866
    %v1868 = vrot.slane %v136, %v1867
    %v1869 = vlaneseq
    %v1870 = vshrl.u32 %v1869, 7
    %v1871 = vsub.s32 6, %v1870
    %v1872 = vrot.slane %v136, %v1871
    %v1873 = vlaneseq
    %v1874 = vshrl.u32 %v1873, 7
    %v1875 = vsub.s32 7, %v1874
    %v1876 = vrot.slane %v136, %v1875
    %v1877 = vlaneseq
    %v1878 = vshrl.u32 %v1877, 7
    %v1879 = vsub.s32 0, %v1878
    %v1880 = vrot.slane %v137, %v1879
    %v1881 = vlaneseq
    %v1882 = vshrl.u32 %v1881, 7
    %v1883 = vsub.s32 1, %v1882
    %v1884 = vrot.slane %v137, %v1883
    %v1885 = vlaneseq
    %v1886 = vshrl.u32 %v1885, 7
    %v1887 = vsub.s32 2, %v1886
    %v1888 = vrot.slane %v137, %v1887
    %v1889 = vlaneseq
    %v1890 = vshrl.u32 %v1889, 7
    %v1891 = vsub.s32 3, %v1890
    %v1892 = vrot.slane %v137, %v1891
    %v1893 = vlaneseq
    %v1894 = vshrl.u32 %v1893, 7
    %v1895 = vsub.s32 4, %v1894
    %v1896 = vrot.slane %v137, %v1895
    %v1897 = vlaneseq
    %v1898 = vshrl.u32 %v1897, 7
    %v1899 = vsub.s32 5, %v1898
    %v1900 = vrot.slane %v137, %v1899
    %v1901 = vlaneseq
    %v1902 = vshrl.u32 %v1901, 7
    %v1903 = vsub.s32 6, %v1902
    %v1904 = vrot.slane %v137, %v1903
    %v1905 = vlaneseq
    %v1906 = vshrl.u32 %v1905, 7
    %v1907 = vsub.s32 7, %v1906
    %v1908 = vrot.slane %v137, %v1907
    %v1909 = vlaneseq
    %v1910 = vshrl.u32 %v1909, 7
    %v1911 = vsub.s32 0, %v1910
    %v1912 = vrot.slane %v138, %v1911
    %v1913 = vlaneseq
    %v1914 = vshrl.u32 %v1913, 7
    %v1915 = vsub.s32 1, %v1914
    %v1916 = vrot.slane %v138, %v1915
    %v1917 = vlaneseq
    %v1918 = vshrl.u32 %v1917, 7
    %v1919 = vsub.s32 2, %v1918
    %v1920 = vrot.slane %v138, %v1919
    %v1921 = vlaneseq
    %v1922 = vshrl.u32 %v1921, 7
    %v1923 = vsub.s32 3, %v1922
    %v1924 = vrot.slane %v138, %v1923
    %v1925 = vlaneseq
    %v1926 = vshrl.u32 %v1925, 7
    %v1927 = vsub.s32 4, %v1926
    %v1928 = vrot.slane %v138, %v1927
    %v1929 = vlaneseq
    %v1930 = vshrl.u32 %v1929, 7
    %v1931 = vsub.s32 5, %v1930
    %v1932 = vrot.slane %v138, %v1931
    %v1933 = vlaneseq
    %v1934 = vshrl.u32 %v1933, 7
    %v1935 = vsub.s32 6, %v1934
    %v1936 = vrot.slane %v138, %v1935
    %v1937 = vlaneseq
    %v1938 = vshrl.u32 %v1937, 7
    %v1939 = vsub.s32 7, %v1938
    %v1940 = vrot.slane %v138, %v1939
    %v1941 = vlaneseq
    %v1942 = vshrl.u32 %v1941, 7
    %v1943 = vsub.s32 0, %v1942
    %v1944 = vrot.slane %v139, %v1943
    %v1945 = vlaneseq
    %v1946 = vshrl.u32 %v1945, 7
    %v1947 = vsub.s32 1, %v1946
    %v1948 = vrot.slane %v139, %v1947
    %v1949 = vlaneseq
    %v1950 = vshrl.u32 %v1949, 7
    %v1951 = vsub.s32 2, %v1950
    %v1952 = vrot.slane %v139, %v1951
    %v1953 = vlaneseq
    %v1954 = vshrl.u32 %v1953, 7
    %v1955 = vsub.s32 3, %v1954
    %v1956 = vrot.slane %v139, %v1955
    %v1957 = vlaneseq
    %v1958 = vshrl.u32 %v1957, 7
    %v1959 = vsub.s32 4, %v1958
    %v1960 = vrot.slane %v139, %v1959
    %v1961 = vlaneseq
    %v1962 = vshrl.u32 %v1961, 7
    %v1963 = vsub.s32 5, %v1962
    %v1964 = vrot.slane %v139, %v1963
    %v1965 = vlaneseq
    %v1966 = vshrl.u32 %v1965, 7
    %v1967 = vsub.s32 6, %v1966
    %v1968 = vrot.slane %v139, %v1967
    %v1969 = vlaneseq
    %v1970 = vshrl.u32 %v1969, 7
    %v1971 = vsub.s32 7, %v1970
    %v1972 = vrot.slane %v139, %v1971
    %v1973 = vlaneseq
    %v1974 = vshrl.u32 %v1973, 7
    %v1975 = vsub.s32 0, %v1974
    %v1976 = vrot.slane %v140, %v1975
    %v1977 = vlaneseq
    %v1978 = vshrl.u32 %v1977, 7
    %v1979 = vsub.s32 1, %v1978
    %v1980 = vrot.slane %v140, %v1979
    %v1981 = vlaneseq
    %v1982 = vshrl.u32 %v1981, 7
    %v1983 = vsub.s32 2, %v1982
    %v1984 = vrot.slane %v140, %v1983
    %v1985 = vlaneseq
    %v1986 = vshrl.u32 %v1985, 7
    %v1987 = vsub.s32 3, %v1986
    %v1988 = vrot.slane %v140, %v1987
    %v1989 = vlaneseq
    %v1990 = vshrl.u32 %v1989, 7
    %v1991 = vsub.s32 4, %v1990
    %v1992 = vrot.slane %v140, %v1991
    %v1993 = vlaneseq
    %v1994 = vshrl.u32 %v1993, 7
    %v1995 = vsub.s32 5, %v1994
    %v1996 = vrot.slane %v140, %v1995
    %v1997 = vlaneseq
    %v1998 = vshrl.u32 %v1997, 7
    %v1999 = vsub.s32 6, %v1998
    %v2000 = vrot.slane %v140, %v1999
    %v2001 = vlaneseq
    %v2002 = vshrl.u32 %v2001, 7
    %v2003 = vsub.s32 7, %v2002
    %v2004 = vrot.slane %v140, %v2003
    %v2005 = vlaneseq
    %v2006 = vshrl.u32 %v2005, 7
    %v2007 = vsub.s32 0, %v2006
    %v2008 = vrot.slane %v141, %v2007
    %v2009 = vlaneseq
    %v2010 = vshrl.u32 %v2009, 7
    %v2011 = vsub.s32 1, %v2010
    %v2012 = vrot.slane %v141, %v2011
    %v2013 = vlaneseq
    %v2014 = vshrl.u32 %v2013, 7
    %v2015 = vsub.s32 2, %v2014
    %v2016 = vrot.slane %v141, %v2015
    %v2017 = vlaneseq
    %v2018 = vshrl.u32 %v2017, 7
    %v2019 = vsub.s32 3, %v2018
    %v2020 = vrot.slane %v141, %v2019
    %v2021 = vlaneseq
    %v2022 = vshrl.u32 %v2021, 7
    %v2023 = vsub.s32 4, %v2022
    %v2024 = vrot.slane %v141, %v2023
    %v2025 = vlaneseq
    %v2026 = vshrl.u32 %v2025, 7
    %v2027 = vsub.s32 5, %v2026
    %v2028 = vrot.slane %v141, %v2027
    %v2029 = vlaneseq
    %v2030 = vshrl.u32 %v2029, 7
    %v2031 = vsub.s32 6, %v2030
    %v2032 = vrot.slane %v141, %v2031
    %v2033 = vlaneseq
    %v2034 = vshrl.u32 %v2033, 7
    %v2035 = vsub.s32 7, %v2034
    %v2036 = vrot.slane %v141, %v2035
    %v2037 = vlaneseq
    %v2038 = vshrl.u32 %v2037, 7
    %v2039 = vsub.s32 0, %v2038
    %v2040 = vrot.slane %v142, %v2039
    %v2041 = vlaneseq
    %v2042 = vshrl.u32 %v2041, 7
    %v2043 = vsub.s32 1, %v2042
    %v2044 = vrot.slane %v142, %v2043
    %v2045 = vlaneseq
    %v2046 = vshrl.u32 %v2045, 7
    %v2047 = vsub.s32 2, %v2046
    %v2048 = vrot.slane %v142, %v2047
    %v2049 = vlaneseq
    %v2050 = vshrl.u32 %v2049, 7
    %v2051 = vsub.s32 3, %v2050
    %v2052 = vrot.slane %v142, %v2051
    %v2053 = vlaneseq
    %v2054 = vshrl.u32 %v2053, 7
    %v2055 = vsub.s32 4, %v2054
    %v2056 = vrot.slane %v142, %v2055
    %v2057 = vlaneseq
    %v2058 = vshrl.u32 %v2057, 7
    %v2059 = vsub.s32 5, %v2058
    %v2060 = vrot.slane %v142, %v2059
    %v2061 = vlaneseq
    %v2062 = vshrl.u32 %v2061, 7
    %v2063 = vsub.s32 6, %v2062
    %v2064 = vrot.slane %v142, %v2063
    %v2065 = vlaneseq
    %v2066 = vshrl.u32 %v2065, 7
    %v2067 = vsub.s32 7, %v2066
    %v2068 = vrot.slane %v142, %v2067
    %v2069 = vlaneseq
    %v2070 = vshrl.u32 %v2069, 7
    %v2071 = vsub.s32 0, %v2070
    %v2072 = vrot.slane %v143, %v2071
    %v2073 = vlaneseq
    %v2074 = vshrl.u32 %v2073, 7
    %v2075 = vsub.s32 1, %v2074
    %v2076 = vrot.slane %v143, %v2075
    %v2077 = vlaneseq
    %v2078 = vshrl.u32 %v2077, 7
    %v2079 = vsub.s32 2, %v2078
    %v2080 = vrot.slane %v143, %v2079
    %v2081 = vlaneseq
    %v2082 = vshrl.u32 %v2081, 7
    %v2083 = vsub.s32 3, %v2082
    %v2084 = vrot.slane %v143, %v2083
    %v2085 = vlaneseq
    %v2086 = vshrl.u32 %v2085, 7
    %v2087 = vsub.s32 4, %v2086
    %v2088 = vrot.slane %v143, %v2087
    %v2089 = vlaneseq
    %v2090 = vshrl.u32 %v2089, 7
    %v2091 = vsub.s32 5, %v2090
    %v2092 = vrot.slane %v143, %v2091
    %v2093 = vlaneseq
    %v2094 = vshrl.u32 %v2093, 7
    %v2095 = vsub.s32 6, %v2094
    %v2096 = vrot.slane %v143, %v2095
    %v2097 = vlaneseq
    %v2098 = vshrl.u32 %v2097, 7
    %v2099 = vsub.s32 7, %v2098
    %v2100 = vrot.slane %v143, %v2099
    %v2101 = vlaneseq
    %v2102 = vshrl.u32 %v2101, 7
    %v2103 = vsub.s32 0, %v2102
    %v2104 = vrot.slane %v144, %v2103
    %v2105 = vlaneseq
    %v2106 = vshrl.u32 %v2105, 7
    %v2107 = vsub.s32 1, %v2106
    %v2108 = vrot.slane %v144, %v2107
    %v2109 = vlaneseq
    %v2110 = vshrl.u32 %v2109, 7
    %v2111 = vsub.s32 2, %v2110
    %v2112 = vrot.slane %v144, %v2111
    %v2113 = vlaneseq
    %v2114 = vshrl.u32 %v2113, 7
    %v2115 = vsub.s32 3, %v2114
    %v2116 = vrot.slane %v144, %v2115
    %v2117 = vlaneseq
    %v2118 = vshrl.u32 %v2117, 7
    %v2119 = vsub.s32 4, %v2118
    %v2120 = vrot.slane %v144, %v2119
    %v2121 = vlaneseq
    %v2122 = vshrl.u32 %v2121, 7
    %v2123 = vsub.s32 5, %v2122
    %v2124 = vrot.slane %v144, %v2123
    %v2125 = vlaneseq
    %v2126 = vshrl.u32 %v2125, 7
    %v2127 = vsub.s32 6, %v2126
    %v2128 = vrot.slane %v144, %v2127
    %v2129 = vlaneseq
    %v2130 = vshrl.u32 %v2129, 7
    %v2131 = vsub.s32 7, %v2130
    %v2132 = vrot.slane %v144, %v2131
    %v2133 = vlaneseq
    %v2134 = vshrl.u32 %v2133, 7
    %v2135 = vsub.s32 0, %v2134
    %v2136 = vrot.slane %v145, %v2135
    %v2137 = vlaneseq
    %v2138 = vshrl.u32 %v2137, 7
    %v2139 = vsub.s32 1, %v2138
    %v2140 = vrot.slane %v145, %v2139
    %v2141 = vlaneseq
    %v2142 = vshrl.u32 %v2141, 7
    %v2143 = vsub.s32 2, %v2142
    %v2144 = vrot.slane %v145, %v2143
    %v2145 = vlaneseq
    %v2146 = vshrl.u32 %v2145, 7
    %v2147 = vsub.s32 3, %v2146
    %v2148 = vrot.slane %v145, %v2147
    %v2149 = vlaneseq
    %v2150 = vshrl.u32 %v2149, 7
    %v2151 = vsub.s32 4, %v2150
    %v2152 = vrot.slane %v145, %v2151
    %v2153 = vlaneseq
    %v2154 = vshrl.u32 %v2153, 7
    %v2155 = vsub.s32 5, %v2154
    %v2156 = vrot.slane %v145, %v2155
    %v2157 = vlaneseq
    %v2158 = vshrl.u32 %v2157, 7
    %v2159 = vsub.s32 6, %v2158
    %v2160 = vrot.slane %v145, %v2159
    %v2161 = vlaneseq
    %v2162 = vshrl.u32 %v2161, 7
    %v2163 = vsub.s32 7, %v2162
    %v2164 = vrot.slane %v145, %v2163
    %v2165 = vlaneseq
    %v2166 = vshrl.u32 %v2165, 7
    %v2167 = vsub.s32 0, %v2166
    %v2168 = vrot.slane %v146, %v2167
    %v2169 = vlaneseq
    %v2170 = vshrl.u32 %v2169, 7
    %v2171 = vsub.s32 1, %v2170
    %v2172 = vrot.slane %v146, %v2171
    %v2173 = vlaneseq
    %v2174 = vshrl.u32 %v2173, 7
    %v2175 = vsub.s32 2, %v2174
    %v2176 = vrot.slane %v146, %v2175
    %v2177 = vlaneseq
    %v2178 = vshrl.u32 %v2177, 7
    %v2179 = vsub.s32 3, %v2178
    %v2180 = vrot.slane %v146, %v2179
    %v2181 = vlaneseq
    %v2182 = vshrl.u32 %v2181, 7
    %v2183 = vsub.s32 4, %v2182
    %v2184 = vrot.slane %v146, %v2183
    %v2185 = vlaneseq
    %v2186 = vshrl.u32 %v2185, 7
    %v2187 = vsub.s32 5, %v2186
    %v2188 = vrot.slane %v146, %v2187
    %v2189 = vlaneseq
    %v2190 = vshrl.u32 %v2189, 7
    %v2191 = vsub.s32 6, %v2190
    %v2192 = vrot.slane %v146, %v2191
    %v2193 = vlaneseq
    %v2194 = vshrl.u32 %v2193, 7
    %v2195 = vsub.s32 7, %v2194
    %v2196 = vrot.slane %v146, %v2195
    %v2197 = vlaneseq
    %v2198 = vshrl.u32 %v2197, 7
    %v2199 = vsub.s32 0, %v2198
    %v2200 = vrot.slane %v147, %v2199
    %v2201 = vlaneseq
    %v2202 = vshrl.u32 %v2201, 7
    %v2203 = vsub.s32 1, %v2202
    %v2204 = vrot.slane %v147, %v2203
    %v2205 = vlaneseq
    %v2206 = vshrl.u32 %v2205, 7
    %v2207 = vsub.s32 2, %v2206
    %v2208 = vrot.slane %v147, %v2207
    %v2209 = vlaneseq
    %v2210 = vshrl.u32 %v2209, 7
    %v2211 = vsub.s32 3, %v2210
    %v2212 = vrot.slane %v147, %v2211
    %v2213 = vlaneseq
    %v2214 = vshrl.u32 %v2213, 7
    %v2215 = vsub.s32 4, %v2214
    %v2216 = vrot.slane %v147, %v2215
    %v2217 = vlaneseq
    %v2218 = vshrl.u32 %v2217, 7
    %v2219 = vsub.s32 5, %v2218
    %v2220 = vrot.slane %v147, %v2219
    %v2221 = vlaneseq
    %v2222 = vshrl.u32 %v2221, 7
    %v2223 = vsub.s32 6, %v2222
    %v2224 = vrot.slane %v147, %v2223
    %v2225 = vlaneseq
    %v2226 = vshrl.u32 %v2225, 7
    %v2227 = vsub.s32 7, %v2226
    %v2228 = vrot.slane %v147, %v2227
    %v2229 = vlaneseq
    %v2230 = vshrl.u32 %v2229, 7
    %v2231 = vsub.s32 0, %v2230
    %v2232 = vrot.slane %v148, %v2231
    %v2233 = vlaneseq
    %v2234 = vshrl.u32 %v2233, 7
    %v2235 = vsub.s32 1, %v2234
    %v2236 = vrot.slane %v148, %v2235
    %v2237 = vlaneseq
    %v2238 = vshrl.u32 %v2237, 7
    %v2239 = vsub.s32 2, %v2238
    %v2240 = vrot.slane %v148, %v2239
    %v2241 = vlaneseq
    %v2242 = vshrl.u32 %v2241, 7
    %v2243 = vsub.s32 3, %v2242
    %v2244 = vrot.slane %v148, %v2243
    %v2245 = vlaneseq
    %v2246 = vshrl.u32 %v2245, 7
    %v2247 = vsub.s32 4, %v2246
    %v2248 = vrot.slane %v148, %v2247
    %v2249 = vlaneseq
    %v2250 = vshrl.u32 %v2249, 7
    %v2251 = vsub.s32 5, %v2250
    %v2252 = vrot.slane %v148, %v2251
    %v2253 = vlaneseq
    %v2254 = vshrl.u32 %v2253, 7
    %v2255 = vsub.s32 6, %v2254
    %v2256 = vrot.slane %v148, %v2255
    %v2257 = vlaneseq
    %v2258 = vshrl.u32 %v2257, 7
    %v2259 = vsub.s32 7, %v2258
    %v2260 = vrot.slane %v148, %v2259
    %vm2773 = vcmask 1040384
    %v2774 = vsel %vm2773, %v216, 0.0
    %v2775 = vsel %vm2773, %v220, 0.0
    %v2776 = vadd.f32 %v2774, %v2775
    %v2777 = vsel %vm2773, %v224, 0.0
    %v2778 = vadd.f32 %v2776, %v2777
    %v2779 = vsel %vm2773, %v228, 0.0
    %v2780 = vadd.f32 %v2778, %v2779
    %v2781 = vsel %vm2773, %v232, 0.0
    %v2782 = vadd.f32 %v2780, %v2781
    %v2783 = vsel %vm2773, %v236, 0.0
    %v2784 = vadd.f32 %v2782, %v2783
    %v2785 = vsel %vm2773, %v240, 0.0
    %v2786 = vadd.f32 %v2784, %v2785
    %v2787 = vsel %vm2773, %v244, 0.0
    %v2788 = vadd.f32 %v2786, %v2787
    %v2789 = vsel %vm2773, %v248, 0.0
    %v2790 = vadd.f32 %v2788, %v2789
    %v2791 = vsel %vm2773, %v252, 0.0
    %v2792 = vadd.f32 %v2790, %v2791
    %v2793 = vsel %vm2773, %v256, 0.0
    %v2794 = vadd.f32 %v2792, %v2793
    %v2795 = vsel %vm2773, %v260, 0.0
    %v2796 = vadd.f32 %v2794, %v2795
    %v2797 = vsel %vm2773, %v264, 0.0
    %v2798 = vadd.f32 %v2796, %v2797
    %v2799 = vsel %vm2773, %v268, 0.0
    %v2800 = vadd.f32 %v2798, %v2799
    %v2801 = vsel %vm2773, %v272, 0.0
    %v2802 = vadd.f32 %v2800, %v2801
    %v2803 = vsel %vm2773, %v276, 0.0
    %v2804 = vadd.f32 %v2802, %v2803
    %v2805 = vsel %vm2773, %v280, 0.0
    %v2806 = vadd.f32 %v2804, %v2805
    %v2807 = vsel %vm2773, %v284, 0.0
    %v2808 = vadd.f32 %v2806, %v2807
    %v2809 = vsel %vm2773, %v288, 0.0
    %v2810 = vadd.f32 %v2808, %v2809
    %v2811 = vsel %vm2773, %v292, 0.0
    %v2812 = vadd.f32 %v2810, %v2811
    %v2813 = vsel %vm2773, %v296, 0.0
    %v2814 = vadd.f32 %v2812, %v2813
    %v2815 = vsel %vm2773, %v300, 0.0
    %v2816 = vadd.f32 %v2814, %v2815
    %v2817 = vsel %vm2773, %v304, 0.0
    %v2818 = vadd.f32 %v2816, %v2817
    %v2819 = vsel %vm2773, %v308, 0.0
    %v2820 = vadd.f32 %v2818, %v2819
    %v2821 = vsel %vm2773, %v312, 0.0
    %v2822 = vadd.f32 %v2820, %v2821
    %v2823 = vsel %vm2773, %v316, 0.0
    %v2824 = vadd.f32 %v2822, %v2823
    %v2825 = vsel %vm2773, %v320, 0.0
    %v2826 = vadd.f32 %v2824, %v2825
    %v2827 = vsel %vm2773, %v324, 0.0
    %v2828 = vadd.f32 %v2826, %v2827
    %v2829 = vsel %vm2773, %v328, 0.0
    %v2830 = vadd.f32 %v2828, %v2829
    %v2831 = vsel %vm2773, %v332, 0.0
    %v2832 = vadd.f32 %v2830, %v2831
    %v2833 = vsel %vm2773, %v336, 0.0
    %v2834 = vadd.f32 %v2832, %v2833
    %v2835 = vsel %vm2773, %v340, 0.0
    %v2836 = vadd.f32 %v2834, %v2835
    %v2837 = vsel %vm2773, %v344, 0.0
    %v2838 = vadd.f32 %v2836, %v2837
    %v2839 = vsel %vm2773, %v348, 0.0
    %v2840 = vadd.f32 %v2838, %v2839
    %v2841 = vsel %vm2773, %v352, 0.0
    %v2842 = vadd.f32 %v2840, %v2841
    %v2843 = vsel %vm2773, %v356, 0.0
    %v2844 = vadd.f32 %v2842, %v2843
    %v2845 = vsel %vm2773, %v360, 0.0
    %v2846 = vadd.f32 %v2844, %v2845
    %v2847 = vsel %vm2773, %v364, 0.0
    %v2848 = vadd.f32 %v2846, %v2847
    %v2849 = vsel %vm2773, %v368, 0.0
    %v2850 = vadd.f32 %v2848, %v2849
    %v2851 = vsel %vm2773, %v372, 0.0
    %v2852 = vadd.f32 %v2850, %v2851
    %v2853 = vsel %vm2773, %v376, 0.0
    %v2854 = vadd.f32 %v2852, %v2853
    %v2855 = vsel %vm2773, %v380, 0.0
    %v2856 = vadd.f32 %v2854, %v2855
    %v2857 = vsel %vm2773, %v384, 0.0
    %v2858 = vadd.f32 %v2856, %v2857
    %v2859 = vsel %vm2773, %v388, 0.0
    %v2860 = vadd.f32 %v2858, %v2859
    %v2861 = vsel %vm2773, %v392, 0.0
    %v2862 = vadd.f32 %v2860, %v2861
    %v2863 = vsel %vm2773, %v396, 0.0
    %v2864 = vadd.f32 %v2862, %v2863
    %v2865 = vsel %vm2773, %v400, 0.0
    %v2866 = vadd.f32 %v2864, %v2865
    %v2867 = vsel %vm2773, %v404, 0.0
    %v2868 = vadd.f32 %v2866, %v2867
    %v2869 = vsel %vm2773, %v408, 0.0
    %v2870 = vadd.f32 %v2868, %v2869
    %v2871 = vsel %vm2773, %v412, 0.0
    %v2872 = vadd.f32 %v2870, %v2871
    %v2873 = vsel %vm2773, %v416, 0.0
    %v2874 = vadd.f32 %v2872, %v2873
    %v2875 = vsel %vm2773, %v420, 0.0
    %v2876 = vadd.f32 %v2874, %v2875
    %v2877 = vsel %vm2773, %v424, 0.0
    %v2878 = vadd.f32 %v2876, %v2877
    %v2879 = vsel %vm2773, %v428, 0.0
    %v2880 = vadd.f32 %v2878, %v2879
    %v2881 = vsel %vm2773, %v432, 0.0
    %v2882 = vadd.f32 %v2880, %v2881
    %v2883 = vsel %vm2773, %v436, 0.0
    %v2884 = vadd.f32 %v2882, %v2883
    %v2885 = vsel %vm2773, %v440, 0.0
    %v2886 = vadd.f32 %v2884, %v2885
    %v2887 = vsel %vm2773, %v444, 0.0
    %v2888 = vadd.f32 %v2886, %v2887
    %v2889 = vsel %vm2773, %v448, 0.0
    %v2890 = vadd.f32 %v2888, %v2889
    %v2891 = vsel %vm2773, %v452, 0.0
    %v2892 = vadd.f32 %v2890, %v2891
    %v2893 = vsel %vm2773, %v456, 0.0
    %v2894 = vadd.f32 %v2892, %v2893
    %v2895 = vsel %vm2773, %v460, 0.0
    %v2896 = vadd.f32 %v2894, %v2895
    %v2897 = vsel %vm2773, %v464, 0.0
    %v2898 = vadd.f32 %v2896, %v2897
    %v2899 = vsel %vm2773, %v468, 0.0
    %v2900 = vadd.f32 %v2898, %v2899
    %v2901 = vsel %vm2773, %v472, 0.0
    %v2902 = vadd.f32 %v2900, %v2901
    %v2903 = vsel %vm2773, %v476, 0.0
    %v2904 = vadd.f32 %v2902, %v2903
    %v2905 = vsel %vm2773, %v480, 0.0
    %v2906 = vadd.f32 %v2904, %v2905
    %v2907 = vsel %vm2773, %v484, 0.0
    %v2908 = vadd.f32 %v2906, %v2907
    %v2909 = vsel %vm2773, %v488, 0.0
    %v2910 = vadd.f32 %v2908, %v2909
    %v2911 = vsel %vm2773, %v492, 0.0
    %v2912 = vadd.f32 %v2910, %v2911
    %v2913 = vsel %vm2773, %v496, 0.0
    %v2914 = vadd.f32 %v2912, %v2913
    %v2915 = vsel %vm2773, %v500, 0.0
    %v2916 = vadd.f32 %v2914, %v2915
    %v2917 = vsel %vm2773, %v504, 0.0
    %v2918 = vadd.f32 %v2916, %v2917
    %v2919 = vsel %vm2773, %v508, 0.0
    %v2920 = vadd.f32 %v2918, %v2919
    %v2921 = vsel %vm2773, %v512, 0.0
    %v2922 = vadd.f32 %v2920, %v2921
    %v2923 = vsel %vm2773, %v516, 0.0
    %v2924 = vadd.f32 %v2922, %v2923
    %v2925 = vsel %vm2773, %v520, 0.0
    %v2926 = vadd.f32 %v2924, %v2925
    %v2927 = vsel %vm2773, %v524, 0.0
    %v2928 = vadd.f32 %v2926, %v2927
    %v2929 = vsel %vm2773, %v528, 0.0
    %v2930 = vadd.f32 %v2928, %v2929
    %v2931 = vsel %vm2773, %v532, 0.0
    %v2932 = vadd.f32 %v2930, %v2931
    %v2933 = vsel %vm2773, %v536, 0.0
    %v2934 = vadd.f32 %v2932, %v2933
    %v2935 = vsel %vm2773, %v540, 0.0
    %v2936 = vadd.f32 %v2934, %v2935
    %v2937 = vsel %vm2773, %v544, 0.0
    %v2938 = vadd.f32 %v2936, %v2937
    %v2939 = vsel %vm2773, %v548, 0.0
    %v2940 = vadd.f32 %v2938, %v2939
    %v2941 = vsel %vm2773, %v552, 0.0
    %v2942 = vadd.f32 %v2940, %v2941
    %v2943 = vsel %vm2773, %v556, 0.0
    %v2944 = vadd.f32 %v2942, %v2943
    %v2945 = vsel %vm2773, %v560, 0.0
    %v2946 = vadd.f32 %v2944, %v2945
    %v2947 = vsel %vm2773, %v564, 0.0
    %v2948 = vadd.f32 %v2946, %v2947
    %v2949 = vsel %vm2773, %v568, 0.0
    %v2950 = vadd.f32 %v2948, %v2949
    %v2951 = vsel %vm2773, %v572, 0.0
    %v2952 = vadd.f32 %v2950, %v2951
    %v2953 = vsel %vm2773, %v576, 0.0
    %v2954 = vadd.f32 %v2952, %v2953
    %v2955 = vsel %vm2773, %v580, 0.0
    %v2956 = vadd.f32 %v2954, %v2955
    %v2957 = vsel %vm2773, %v584, 0.0
    %v2958 = vadd.f32 %v2956, %v2957
    %v2959 = vsel %vm2773, %v588, 0.0
    %v2960 = vadd.f32 %v2958, %v2959
    %v2961 = vsel %vm2773, %v592, 0.0
    %v2962 = vadd.f32 %v2960, %v2961
    %v2963 = vsel %vm2773, %v596, 0.0
    %v2964 = vadd.f32 %v2962, %v2963
    %v2965 = vsel %vm2773, %v600, 0.0
    %v2966 = vadd.f32 %v2964, %v2965
    %v2967 = vsel %vm2773, %v604, 0.0
    %v2968 = vadd.f32 %v2966, %v2967
    %v2969 = vsel %vm2773, %v608, 0.0
    %v2970 = vadd.f32 %v2968, %v2969
    %v2971 = vsel %vm2773, %v612, 0.0
    %v2972 = vadd.f32 %v2970, %v2971
    %v2973 = vsel %vm2773, %v616, 0.0
    %v2974 = vadd.f32 %v2972, %v2973
    %v2975 = vsel %vm2773, %v620, 0.0
    %v2976 = vadd.f32 %v2974, %v2975
    %v2977 = vsel %vm2773, %v624, 0.0
    %v2978 = vadd.f32 %v2976, %v2977
    %v2979 = vsel %vm2773, %v628, 0.0
    %v2980 = vadd.f32 %v2978, %v2979
    %v2981 = vsel %vm2773, %v632, 0.0
    %v2982 = vadd.f32 %v2980, %v2981
    %v2983 = vsel %vm2773, %v636, 0.0
    %v2984 = vadd.f32 %v2982, %v2983
    %v2985 = vsel %vm2773, %v640, 0.0
    %v2986 = vadd.f32 %v2984, %v2985
    %v2987 = vsel %vm2773, %v644, 0.0
    %v2988 = vadd.f32 %v2986, %v2987
    %v2989 = vsel %vm2773, %v648, 0.0
    %v2990 = vadd.f32 %v2988, %v2989
    %v2991 = vsel %vm2773, %v652, 0.0
    %v2992 = vadd.f32 %v2990, %v2991
    %v2993 = vsel %vm2773, %v656, 0.0
    %v2994 = vadd.f32 %v2992, %v2993
    %v2995 = vsel %vm2773, %v660, 0.0
    %v2996 = vadd.f32 %v2994, %v2995
    %v2997 = vsel %vm2773, %v664, 0.0
    %v2998 = vadd.f32 %v2996, %v2997
    %v2999 = vsel %vm2773, %v668, 0.0
    %v3000 = vadd.f32 %v2998, %v2999
    %v3001 = vsel %vm2773, %v672, 0.0
    %v3002 = vadd.f32 %v3000, %v3001
    %v3003 = vsel %vm2773, %v676, 0.0
    %v3004 = vadd.f32 %v3002, %v3003
    %v3005 = vsel %vm2773, %v680, 0.0
    %v3006 = vadd.f32 %v3004, %v3005
    %v3007 = vsel %vm2773, %v684, 0.0
    %v3008 = vadd.f32 %v3006, %v3007
    %v3009 = vsel %vm2773, %v688, 0.0
    %v3010 = vadd.f32 %v3008, %v3009
    %v3011 = vsel %vm2773, %v692, 0.0
    %v3012 = vadd.f32 %v3010, %v3011
    %v3013 = vsel %vm2773, %v696, 0.0
    %v3014 = vadd.f32 %v3012, %v3013
    %v3015 = vsel %vm2773, %v700, 0.0
    %v3016 = vadd.f32 %v3014, %v3015
    %v3017 = vsel %vm2773, %v704, 0.0
    %v3018 = vadd.f32 %v3016, %v3017
    %v3019 = vsel %vm2773, %v708, 0.0
    %v3020 = vadd.f32 %v3018, %v3019
    %v3021 = vsel %vm2773, %v712, 0.0
    %v3022 = vadd.f32 %v3020, %v3021
    %v3023 = vsel %vm2773, %v716, 0.0
    %v3024 = vadd.f32 %v3022, %v3023
    %v3025 = vsel %vm2773, %v720, 0.0
    %v3026 = vadd.f32 %v3024, %v3025
    %v3027 = vsel %vm2773, %v724, 0.0
    %v3028 = vadd.f32 %v3026, %v3027
    %v3029 = vsel %vm2773, %v728, 0.0
    %v3030 = vadd.f32 %v3028, %v3029
    %v3031 = vsel %vm2773, %v732, 0.0
    %v3032 = vadd.f32 %v3030, %v3031
    %v3033 = vsel %vm2773, %v736, 0.0
    %v3034 = vadd.f32 %v3032, %v3033
    %v3035 = vsel %vm2773, %v740, 0.0
    %v3036 = vadd.f32 %v3034, %v3035
    %v3037 = vsel %vm2773, %v744, 0.0
    %v3038 = vadd.f32 %v3036, %v3037
    %v3039 = vsel %vm2773, %v748, 0.0
    %v3040 = vadd.f32 %v3038, %v3039
    %v3041 = vsel %vm2773, %v752, 0.0
    %v3042 = vadd.f32 %v3040, %v3041
    %v3043 = vsel %vm2773, %v756, 0.0
    %v3044 = vadd.f32 %v3042, %v3043
    %v3045 = vsel %vm2773, %v760, 0.0
    %v3046 = vadd.f32 %v3044, %v3045
    %v3047 = vsel %vm2773, %v764, 0.0
    %v3048 = vadd.f32 %v3046, %v3047
    %v3049 = vsel %vm2773, %v768, 0.0
    %v3050 = vadd.f32 %v3048, %v3049
    %v3051 = vsel %vm2773, %v772, 0.0
    %v3052 = vadd.f32 %v3050, %v3051
    %v3053 = vsel %vm2773, %v776, 0.0
    %v3054 = vadd.f32 %v3052, %v3053
    %v3055 = vsel %vm2773, %v780, 0.0
    %v3056 = vadd.f32 %v3054, %v3055
    %v3057 = vsel %vm2773, %v784, 0.0
    %v3058 = vadd.f32 %v3056, %v3057
    %v3059 = vsel %vm2773, %v788, 0.0
    %v3060 = vadd.f32 %v3058, %v3059
    %v3061 = vsel %vm2773, %v792, 0.0
    %v3062 = vadd.f32 %v3060, %v3061
    %v3063 = vsel %vm2773, %v796, 0.0
    %v3064 = vadd.f32 %v3062, %v3063
    %v3065 = vsel %vm2773, %v800, 0.0
    %v3066 = vadd.f32 %v3064, %v3065
    %v3067 = vsel %vm2773, %v804, 0.0
    %v3068 = vadd.f32 %v3066, %v3067
    %v3069 = vsel %vm2773, %v808, 0.0
    %v3070 = vadd.f32 %v3068, %v3069
    %v3071 = vsel %vm2773, %v812, 0.0
    %v3072 = vadd.f32 %v3070, %v3071
    %v3073 = vsel %vm2773, %v816, 0.0
    %v3074 = vadd.f32 %v3072, %v3073
    %v3075 = vsel %vm2773, %v820, 0.0
    %v3076 = vadd.f32 %v3074, %v3075
    %v3077 = vsel %vm2773, %v824, 0.0
    %v3078 = vadd.f32 %v3076, %v3077
    %v3079 = vsel %vm2773, %v828, 0.0
    %v3080 = vadd.f32 %v3078, %v3079
    %v3081 = vsel %vm2773, %v832, 0.0
    %v3082 = vadd.f32 %v3080, %v3081
    %v3083 = vsel %vm2773, %v836, 0.0
    %v3084 = vadd.f32 %v3082, %v3083
    %v3085 = vsel %vm2773, %v840, 0.0
    %v3086 = vadd.f32 %v3084, %v3085
    %v3087 = vsel %vm2773, %v844, 0.0
    %v3088 = vadd.f32 %v3086, %v3087
    %v3089 = vsel %vm2773, %v848, 0.0
    %v3090 = vadd.f32 %v3088, %v3089
    %v3091 = vsel %vm2773, %v852, 0.0
    %v3092 = vadd.f32 %v3090, %v3091
    %v3093 = vsel %vm2773, %v856, 0.0
    %v3094 = vadd.f32 %v3092, %v3093
    %v3095 = vsel %vm2773, %v860, 0.0
    %v3096 = vadd.f32 %v3094, %v3095
    %v3097 = vsel %vm2773, %v864, 0.0
    %v3098 = vadd.f32 %v3096, %v3097
    %v3099 = vsel %vm2773, %v868, 0.0
    %v3100 = vadd.f32 %v3098, %v3099
    %v3101 = vsel %vm2773, %v872, 0.0
    %v3102 = vadd.f32 %v3100, %v3101
    %v3103 = vsel %vm2773, %v876, 0.0
    %v3104 = vadd.f32 %v3102, %v3103
    %v3105 = vsel %vm2773, %v880, 0.0
    %v3106 = vadd.f32 %v3104, %v3105
    %v3107 = vsel %vm2773, %v884, 0.0
    %v3108 = vadd.f32 %v3106, %v3107
    %v3109 = vsel %vm2773, %v888, 0.0
    %v3110 = vadd.f32 %v3108, %v3109
    %v3111 = vsel %vm2773, %v892, 0.0
    %v3112 = vadd.f32 %v3110, %v3111
    %v3113 = vsel %vm2773, %v896, 0.0
    %v3114 = vadd.f32 %v3112, %v3113
    %v3115 = vsel %vm2773, %v900, 0.0
    %v3116 = vadd.f32 %v3114, %v3115
    %v3117 = vsel %vm2773, %v904, 0.0
    %v3118 = vadd.f32 %v3116, %v3117
    %v3119 = vsel %vm2773, %v908, 0.0
    %v3120 = vadd.f32 %v3118, %v3119
    %v3121 = vsel %vm2773, %v912, 0.0
    %v3122 = vadd.f32 %v3120, %v3121
    %v3123 = vsel %vm2773, %v916, 0.0
    %v3124 = vadd.f32 %v3122, %v3123
    %v3125 = vsel %vm2773, %v920, 0.0
    %v3126 = vadd.f32 %v3124, %v3125
    %v3127 = vsel %vm2773, %v924, 0.0
    %v3128 = vadd.f32 %v3126, %v3127
    %v3129 = vsel %vm2773, %v928, 0.0
    %v3130 = vadd.f32 %v3128, %v3129
    %v3131 = vsel %vm2773, %v932, 0.0
    %v3132 = vadd.f32 %v3130, %v3131
    %v3133 = vsel %vm2773, %v936, 0.0
    %v3134 = vadd.f32 %v3132, %v3133
    %v3135 = vsel %vm2773, %v940, 0.0
    %v3136 = vadd.f32 %v3134, %v3135
    %v3137 = vsel %vm2773, %v944, 0.0
    %v3138 = vadd.f32 %v3136, %v3137
    %v3139 = vsel %vm2773, %v948, 0.0
    %v3140 = vadd.f32 %v3138, %v3139
    %v3141 = vsel %vm2773, %v952, 0.0
    %v3142 = vadd.f32 %v3140, %v3141
    %v3143 = vsel %vm2773, %v956, 0.0
    %v3144 = vadd.f32 %v3142, %v3143
    %v3145 = vsel %vm2773, %v960, 0.0
    %v3146 = vadd.f32 %v3144, %v3145
    %v3147 = vsel %vm2773, %v964, 0.0
    %v3148 = vadd.f32 %v3146, %v3147
    %v3149 = vsel %vm2773, %v968, 0.0
    %v3150 = vadd.f32 %v3148, %v3149
    %v3151 = vsel %vm2773, %v972, 0.0
    %v3152 = vadd.f32 %v3150, %v3151
    %v3153 = vsel %vm2773, %v976, 0.0
    %v3154 = vadd.f32 %v3152, %v3153
    %v3155 = vsel %vm2773, %v980, 0.0
    %v3156 = vadd.f32 %v3154, %v3155
    %v3157 = vsel %vm2773, %v984, 0.0
    %v3158 = vadd.f32 %v3156, %v3157
    %v3159 = vsel %vm2773, %v988, 0.0
    %v3160 = vadd.f32 %v3158, %v3159
    %v3161 = vsel %vm2773, %v992, 0.0
    %v3162 = vadd.f32 %v3160, %v3161
    %v3163 = vsel %vm2773, %v996, 0.0
    %v3164 = vadd.f32 %v3162, %v3163
    %v3165 = vsel %vm2773, %v1000, 0.0
    %v3166 = vadd.f32 %v3164, %v3165
    %v3167 = vsel %vm2773, %v1004, 0.0
    %v3168 = vadd.f32 %v3166, %v3167
    %v3169 = vsel %vm2773, %v1008, 0.0
    %v3170 = vadd.f32 %v3168, %v3169
    %v3171 = vsel %vm2773, %v1012, 0.0
    %v3172 = vadd.f32 %v3170, %v3171
    %v3173 = vsel %vm2773, %v1016, 0.0
    %v3174 = vadd.f32 %v3172, %v3173
    %v3175 = vsel %vm2773, %v1020, 0.0
    %v3176 = vadd.f32 %v3174, %v3175
    %v3177 = vsel %vm2773, %v1024, 0.0
    %v3178 = vadd.f32 %v3176, %v3177
    %v3179 = vsel %vm2773, %v1028, 0.0
    %v3180 = vadd.f32 %v3178, %v3179
    %v3181 = vsel %vm2773, %v1032, 0.0
    %v3182 = vadd.f32 %v3180, %v3181
    %v3183 = vsel %vm2773, %v1036, 0.0
    %v3184 = vadd.f32 %v3182, %v3183
    %v3185 = vsel %vm2773, %v1040, 0.0
    %v3186 = vadd.f32 %v3184, %v3185
    %v3187 = vsel %vm2773, %v1044, 0.0
    %v3188 = vadd.f32 %v3186, %v3187
    %v3189 = vsel %vm2773, %v1048, 0.0
    %v3190 = vadd.f32 %v3188, %v3189
    %v3191 = vsel %vm2773, %v1052, 0.0
    %v3192 = vadd.f32 %v3190, %v3191
    %v3193 = vsel %vm2773, %v1056, 0.0
    %v3194 = vadd.f32 %v3192, %v3193
    %v3195 = vsel %vm2773, %v1060, 0.0
    %v3196 = vadd.f32 %v3194, %v3195
    %v3197 = vsel %vm2773, %v1064, 0.0
    %v3198 = vadd.f32 %v3196, %v3197
    %v3199 = vsel %vm2773, %v1068, 0.0
    %v3200 = vadd.f32 %v3198, %v3199
    %v3201 = vsel %vm2773, %v1072, 0.0
    %v3202 = vadd.f32 %v3200, %v3201
    %v3203 = vsel %vm2773, %v1076, 0.0
    %v3204 = vadd.f32 %v3202, %v3203
    %v3205 = vsel %vm2773, %v1080, 0.0
    %v3206 = vadd.f32 %v3204, %v3205
    %v3207 = vsel %vm2773, %v1084, 0.0
    %v3208 = vadd.f32 %v3206, %v3207
    %v3209 = vsel %vm2773, %v1088, 0.0
    %v3210 = vadd.f32 %v3208, %v3209
    %v3211 = vsel %vm2773, %v1092, 0.0
    %v3212 = vadd.f32 %v3210, %v3211
    %v3213 = vsel %vm2773, %v1096, 0.0
    %v3214 = vadd.f32 %v3212, %v3213
    %v3215 = vsel %vm2773, %v1100, 0.0
    %v3216 = vadd.f32 %v3214, %v3215
    %v3217 = vsel %vm2773, %v1104, 0.0
    %v3218 = vadd.f32 %v3216, %v3217
    %v3219 = vsel %vm2773, %v1108, 0.0
    %v3220 = vadd.f32 %v3218, %v3219
    %v3221 = vsel %vm2773, %v1112, 0.0
    %v3222 = vadd.f32 %v3220, %v3221
    %v3223 = vsel %vm2773, %v1116, 0.0
    %v3224 = vadd.f32 %v3222, %v3223
    %v3225 = vsel %vm2773, %v1120, 0.0
    %v3226 = vadd.f32 %v3224, %v3225
    %v3227 = vsel %vm2773, %v1124, 0.0
    %v3228 = vadd.f32 %v3226, %v3227
    %v3229 = vsel %vm2773, %v1128, 0.0
    %v3230 = vadd.f32 %v3228, %v3229
    %v3231 = vsel %vm2773, %v1132, 0.0
    %v3232 = vadd.f32 %v3230, %v3231
    %v3233 = vsel %vm2773, %v1136, 0.0
    %v3234 = vadd.f32 %v3232, %v3233
    %v3235 = vsel %vm2773, %v1140, 0.0
    %v3236 = vadd.f32 %v3234, %v3235
    %v3237 = vsel %vm2773, %v1144, 0.0
    %v3238 = vadd.f32 %v3236, %v3237
    %v3239 = vsel %vm2773, %v1148, 0.0
    %v3240 = vadd.f32 %v3238, %v3239
    %v3241 = vsel %vm2773, %v1152, 0.0
    %v3242 = vadd.f32 %v3240, %v3241
    %v3243 = vsel %vm2773, %v1156, 0.0
    %v3244 = vadd.f32 %v3242, %v3243
    %v3245 = vsel %vm2773, %v1160, 0.0
    %v3246 = vadd.f32 %v3244, %v3245
    %v3247 = vsel %vm2773, %v1164, 0.0
    %v3248 = vadd.f32 %v3246, %v3247
    %v3249 = vsel %vm2773, %v1168, 0.0
    %v3250 = vadd.f32 %v3248, %v3249
    %v3251 = vsel %vm2773, %v1172, 0.0
    %v3252 = vadd.f32 %v3250, %v3251
    %v3253 = vsel %vm2773, %v1176, 0.0
    %v3254 = vadd.f32 %v3252, %v3253
    %v3255 = vsel %vm2773, %v1180, 0.0
    %v3256 = vadd.f32 %v3254, %v3255
    %v3257 = vsel %vm2773, %v1184, 0.0
    %v3258 = vadd.f32 %v3256, %v3257
    %v3259 = vsel %vm2773, %v1188, 0.0
    %v3260 = vadd.f32 %v3258, %v3259
    %v3261 = vsel %vm2773, %v1192, 0.0
    %v3262 = vadd.f32 %v3260, %v3261
    %v3263 = vsel %vm2773, %v1196, 0.0
    %v3264 = vadd.f32 %v3262, %v3263
    %v3265 = vsel %vm2773, %v1200, 0.0
    %v3266 = vadd.f32 %v3264, %v3265
    %v3267 = vsel %vm2773, %v1204, 0.0
    %v3268 = vadd.f32 %v3266, %v3267
    %v3269 = vsel %vm2773, %v1208, 0.0
    %v3270 = vadd.f32 %v3268, %v3269
    %v3271 = vsel %vm2773, %v1212, 0.0
    %v3272 = vadd.f32 %v3270, %v3271
    %v3273 = vsel %vm2773, %v1216, 0.0
    %v3274 = vadd.f32 %v3272, %v3273
    %v3275 = vsel %vm2773, %v1220, 0.0
    %v3276 = vadd.f32 %v3274, %v3275
    %v3277 = vsel %vm2773, %v1224, 0.0
    %v3278 = vadd.f32 %v3276, %v3277
    %v3279 = vsel %vm2773, %v1228, 0.0
    %v3280 = vadd.f32 %v3278, %v3279
    %v3281 = vsel %vm2773, %v1232, 0.0
    %v3282 = vadd.f32 %v3280, %v3281
    %v3283 = vsel %vm2773, %v1236, 0.0
    %v3284 = vadd.f32 %v3282, %v3283
    %v3285 = vsel %vm2773, %v1240, 0.0
    %v3286 = vadd.f32 %v3284, %v3285
    %v3287 = vsel %vm2773, %v1244, 0.0
    %v3288 = vadd.f32 %v3286, %v3287
    %v3289 = vsel %vm2773, %v1248, 0.0
    %v3290 = vadd.f32 %v3288, %v3289
    %v3291 = vsel %vm2773, %v1252, 0.0
    %v3292 = vadd.f32 %v3290, %v3291
    %v3293 = vsel %vm2773, %v1256, 0.0
    %v3294 = vadd.f32 %v3292, %v3293
    %v3295 = vsel %vm2773, %v1260, 0.0
    %v3296 = vadd.f32 %v3294, %v3295
    %v3297 = vsel %vm2773, %v1264, 0.0
    %v3298 = vadd.f32 %v3296, %v3297
    %v3299 = vsel %vm2773, %v1268, 0.0
    %v3300 = vadd.f32 %v3298, %v3299
    %v3301 = vsel %vm2773, %v1272, 0.0
    %v3302 = vadd.f32 %v3300, %v3301
    %v3303 = vsel %vm2773, %v1276, 0.0
    %v3304 = vadd.f32 %v3302, %v3303
    %v3305 = vsel %vm2773, %v1280, 0.0
    %v3306 = vadd.f32 %v3304, %v3305
    %v3307 = vsel %vm2773, %v1284, 0.0
    %v3308 = vadd.f32 %v3306, %v3307
    %v3309 = vsel %vm2773, %v1288, 0.0
    %v3310 = vadd.f32 %v3308, %v3309
    %v3311 = vsel %vm2773, %v1292, 0.0
    %v3312 = vadd.f32 %v3310, %v3311
    %v3313 = vsel %vm2773, %v1296, 0.0
    %v3314 = vadd.f32 %v3312, %v3313
    %v3315 = vsel %vm2773, %v1300, 0.0
    %v3316 = vadd.f32 %v3314, %v3315
    %v3317 = vsel %vm2773, %v1304, 0.0
    %v3318 = vadd.f32 %v3316, %v3317
    %v3319 = vsel %vm2773, %v1308, 0.0
    %v3320 = vadd.f32 %v3318, %v3319
    %v3321 = vsel %vm2773, %v1312, 0.0
    %v3322 = vadd.f32 %v3320, %v3321
    %v3323 = vsel %vm2773, %v1316, 0.0
    %v3324 = vadd.f32 %v3322, %v3323
    %v3325 = vsel %vm2773, %v1320, 0.0
    %v3326 = vadd.f32 %v3324, %v3325
    %v3327 = vsel %vm2773, %v1324, 0.0
    %v3328 = vadd.f32 %v3326, %v3327
    %v3329 = vsel %vm2773, %v1328, 0.0
    %v3330 = vadd.f32 %v3328, %v3329
    %v3331 = vsel %vm2773, %v1332, 0.0
    %v3332 = vadd.f32 %v3330, %v3331
    %v3333 = vsel %vm2773, %v1336, 0.0
    %v3334 = vadd.f32 %v3332, %v3333
    %v3335 = vsel %vm2773, %v1340, 0.0
    %v3336 = vadd.f32 %v3334, %v3335
    %v3337 = vsel %vm2773, %v1344, 0.0
    %v3338 = vadd.f32 %v3336, %v3337
    %v3339 = vsel %vm2773, %v1348, 0.0
    %v3340 = vadd.f32 %v3338, %v3339
    %v3341 = vsel %vm2773, %v1352, 0.0
    %v3342 = vadd.f32 %v3340, %v3341
    %v3343 = vsel %vm2773, %v1356, 0.0
    %v3344 = vadd.f32 %v3342, %v3343
    %v3345 = vsel %vm2773, %v1360, 0.0
    %v3346 = vadd.f32 %v3344, %v3345
    %v3347 = vsel %vm2773, %v1364, 0.0
    %v3348 = vadd.f32 %v3346, %v3347
    %v3349 = vsel %vm2773, %v1368, 0.0
    %v3350 = vadd.f32 %v3348, %v3349
    %v3351 = vsel %vm2773, %v1372, 0.0
    %v3352 = vadd.f32 %v3350, %v3351
    %v3353 = vsel %vm2773, %v1376, 0.0
    %v3354 = vadd.f32 %v3352, %v3353
    %v3355 = vsel %vm2773, %v1380, 0.0
    %v3356 = vadd.f32 %v3354, %v3355
    %v3357 = vsel %vm2773, %v1384, 0.0
    %v3358 = vadd.f32 %v3356, %v3357
    %v3359 = vsel %vm2773, %v1388, 0.0
    %v3360 = vadd.f32 %v3358, %v3359
    %v3361 = vsel %vm2773, %v1392, 0.0
    %v3362 = vadd.f32 %v3360, %v3361
    %v3363 = vsel %vm2773, %v1396, 0.0
    %v3364 = vadd.f32 %v3362, %v3363
    %v3365 = vsel %vm2773, %v1400, 0.0
    %v3366 = vadd.f32 %v3364, %v3365
    %v3367 = vsel %vm2773, %v1404, 0.0
    %v3368 = vadd.f32 %v3366, %v3367
    %v3369 = vsel %vm2773, %v1408, 0.0
    %v3370 = vadd.f32 %v3368, %v3369
    %v3371 = vsel %vm2773, %v1412, 0.0
    %v3372 = vadd.f32 %v3370, %v3371
    %v3373 = vsel %vm2773, %v1416, 0.0
    %v3374 = vadd.f32 %v3372, %v3373
    %v3375 = vsel %vm2773, %v1420, 0.0
    %v3376 = vadd.f32 %v3374, %v3375
    %v3377 = vsel %vm2773, %v1424, 0.0
    %v3378 = vadd.f32 %v3376, %v3377
    %v3379 = vsel %vm2773, %v1428, 0.0
    %v3380 = vadd.f32 %v3378, %v3379
    %v3381 = vsel %vm2773, %v1432, 0.0
    %v3382 = vadd.f32 %v3380, %v3381
    %v3383 = vsel %vm2773, %v1436, 0.0
    %v3384 = vadd.f32 %v3382, %v3383
    %v3385 = vsel %vm2773, %v1440, 0.0
    %v3386 = vadd.f32 %v3384, %v3385
    %v3387 = vsel %vm2773, %v1444, 0.0
    %v3388 = vadd.f32 %v3386, %v3387
    %v3389 = vsel %vm2773, %v1448, 0.0
    %v3390 = vadd.f32 %v3388, %v3389
    %v3391 = vsel %vm2773, %v1452, 0.0
    %v3392 = vadd.f32 %v3390, %v3391
    %v3393 = vsel %vm2773, %v1456, 0.0
    %v3394 = vadd.f32 %v3392, %v3393
    %v3395 = vsel %vm2773, %v1460, 0.0
    %v3396 = vadd.f32 %v3394, %v3395
    %v3397 = vsel %vm2773, %v1464, 0.0
    %v3398 = vadd.f32 %v3396, %v3397
    %v3399 = vsel %vm2773, %v1468, 0.0
    %v3400 = vadd.f32 %v3398, %v3399
    %v3401 = vsel %vm2773, %v1472, 0.0
    %v3402 = vadd.f32 %v3400, %v3401
    %v3403 = vsel %vm2773, %v1476, 0.0
    %v3404 = vadd.f32 %v3402, %v3403
    %v3405 = vsel %vm2773, %v1480, 0.0
    %v3406 = vadd.f32 %v3404, %v3405
    %v3407 = vsel %vm2773, %v1484, 0.0
    %v3408 = vadd.f32 %v3406, %v3407
    %v3409 = vsel %vm2773, %v1488, 0.0
    %v3410 = vadd.f32 %v3408, %v3409
    %v3411 = vsel %vm2773, %v1492, 0.0
    %v3412 = vadd.f32 %v3410, %v3411
    %v3413 = vsel %vm2773, %v1496, 0.0
    %v3414 = vadd.f32 %v3412, %v3413
    %v3415 = vsel %vm2773, %v1500, 0.0
    %v3416 = vadd.f32 %v3414, %v3415
    %v3417 = vsel %vm2773, %v1504, 0.0
    %v3418 = vadd.f32 %v3416, %v3417
    %v3419 = vsel %vm2773, %v1508, 0.0
    %v3420 = vadd.f32 %v3418, %v3419
    %v3421 = vsel %vm2773, %v1512, 0.0
    %v3422 = vadd.f32 %v3420, %v3421
    %v3423 = vsel %vm2773, %v1516, 0.0
    %v3424 = vadd.f32 %v3422, %v3423
    %v3425 = vsel %vm2773, %v1520, 0.0
    %v3426 = vadd.f32 %v3424, %v3425
    %v3427 = vsel %vm2773, %v1524, 0.0
    %v3428 = vadd.f32 %v3426, %v3427
    %v3429 = vsel %vm2773, %v1528, 0.0
    %v3430 = vadd.f32 %v3428, %v3429
    %v3431 = vsel %vm2773, %v1532, 0.0
    %v3432 = vadd.f32 %v3430, %v3431
    %v3433 = vsel %vm2773, %v1536, 0.0
    %v3434 = vadd.f32 %v3432, %v3433
    %v3435 = vsel %vm2773, %v1540, 0.0
    %v3436 = vadd.f32 %v3434, %v3435
    %v3437 = vsel %vm2773, %v1544, 0.0
    %v3438 = vadd.f32 %v3436, %v3437
    %v3439 = vsel %vm2773, %v1548, 0.0
    %v3440 = vadd.f32 %v3438, %v3439
    %v3441 = vsel %vm2773, %v1552, 0.0
    %v3442 = vadd.f32 %v3440, %v3441
    %v3443 = vsel %vm2773, %v1556, 0.0
    %v3444 = vadd.f32 %v3442, %v3443
    %v3445 = vsel %vm2773, %v1560, 0.0
    %v3446 = vadd.f32 %v3444, %v3445
    %v3447 = vsel %vm2773, %v1564, 0.0
    %v3448 = vadd.f32 %v3446, %v3447
    %v3449 = vsel %vm2773, %v1568, 0.0
    %v3450 = vadd.f32 %v3448, %v3449
    %v3451 = vsel %vm2773, %v1572, 0.0
    %v3452 = vadd.f32 %v3450, %v3451
    %v3453 = vsel %vm2773, %v1576, 0.0
    %v3454 = vadd.f32 %v3452, %v3453
    %v3455 = vsel %vm2773, %v1580, 0.0
    %v3456 = vadd.f32 %v3454, %v3455
    %v3457 = vsel %vm2773, %v1584, 0.0
    %v3458 = vadd.f32 %v3456, %v3457
    %v3459 = vsel %vm2773, %v1588, 0.0
    %v3460 = vadd.f32 %v3458, %v3459
    %v3461 = vsel %vm2773, %v1592, 0.0
    %v3462 = vadd.f32 %v3460, %v3461
    %v3463 = vsel %vm2773, %v1596, 0.0
    %v3464 = vadd.f32 %v3462, %v3463
    %v3465 = vsel %vm2773, %v1600, 0.0
    %v3466 = vadd.f32 %v3464, %v3465
    %v3467 = vsel %vm2773, %v1604, 0.0
    %v3468 = vadd.f32 %v3466, %v3467
    %v3469 = vsel %vm2773, %v1608, 0.0
    %v3470 = vadd.f32 %v3468, %v3469
    %v3471 = vsel %vm2773, %v1612, 0.0
    %v3472 = vadd.f32 %v3470, %v3471
    %v3473 = vsel %vm2773, %v1616, 0.0
    %v3474 = vadd.f32 %v3472, %v3473
    %v3475 = vsel %vm2773, %v1620, 0.0
    %v3476 = vadd.f32 %v3474, %v3475
    %v3477 = vsel %vm2773, %v1624, 0.0
    %v3478 = vadd.f32 %v3476, %v3477
    %v3479 = vsel %vm2773, %v1628, 0.0
    %v3480 = vadd.f32 %v3478, %v3479
    %v3481 = vsel %vm2773, %v1632, 0.0
    %v3482 = vadd.f32 %v3480, %v3481
    %v3483 = vsel %vm2773, %v1636, 0.0
    %v3484 = vadd.f32 %v3482, %v3483
    %v3485 = vsel %vm2773, %v1640, 0.0
    %v3486 = vadd.f32 %v3484, %v3485
    %v3487 = vsel %vm2773, %v1644, 0.0
    %v3488 = vadd.f32 %v3486, %v3487
    %v3489 = vsel %vm2773, %v1648, 0.0
    %v3490 = vadd.f32 %v3488, %v3489
    %v3491 = vsel %vm2773, %v1652, 0.0
    %v3492 = vadd.f32 %v3490, %v3491
    %v3493 = vsel %vm2773, %v1656, 0.0
    %v3494 = vadd.f32 %v3492, %v3493
    %v3495 = vsel %vm2773, %v1660, 0.0
    %v3496 = vadd.f32 %v3494, %v3495
    %v3497 = vsel %vm2773, %v1664, 0.0
    %v3498 = vadd.f32 %v3496, %v3497
    %v3499 = vsel %vm2773, %v1668, 0.0
    %v3500 = vadd.f32 %v3498, %v3499
    %v3501 = vsel %vm2773, %v1672, 0.0
    %v3502 = vadd.f32 %v3500, %v3501
    %v3503 = vsel %vm2773, %v1676, 0.0
    %v3504 = vadd.f32 %v3502, %v3503
    %v3505 = vsel %vm2773, %v1680, 0.0
    %v3506 = vadd.f32 %v3504, %v3505
    %v3507 = vsel %vm2773, %v1684, 0.0
    %v3508 = vadd.f32 %v3506, %v3507
    %v3509 = vsel %vm2773, %v1688, 0.0
    %v3510 = vadd.f32 %v3508, %v3509
    %v3511 = vsel %vm2773, %v1692, 0.0
    %v3512 = vadd.f32 %v3510, %v3511
    %v3513 = vsel %vm2773, %v1696, 0.0
    %v3514 = vadd.f32 %v3512, %v3513
    %v3515 = vsel %vm2773, %v1700, 0.0
    %v3516 = vadd.f32 %v3514, %v3515
    %v3517 = vsel %vm2773, %v1704, 0.0
    %v3518 = vadd.f32 %v3516, %v3517
    %v3519 = vsel %vm2773, %v1708, 0.0
    %v3520 = vadd.f32 %v3518, %v3519
    %v3521 = vsel %vm2773, %v1712, 0.0
    %v3522 = vadd.f32 %v3520, %v3521
    %v3523 = vsel %vm2773, %v1716, 0.0
    %v3524 = vadd.f32 %v3522, %v3523
    %v3525 = vsel %vm2773, %v1720, 0.0
    %v3526 = vadd.f32 %v3524, %v3525
    %v3527 = vsel %vm2773, %v1724, 0.0
    %v3528 = vadd.f32 %v3526, %v3527
    %v3529 = vsel %vm2773, %v1728, 0.0
    %v3530 = vadd.f32 %v3528, %v3529
    %v3531 = vsel %vm2773, %v1732, 0.0
    %v3532 = vadd.f32 %v3530, %v3531
    %v3533 = vsel %vm2773, %v1736, 0.0
    %v3534 = vadd.f32 %v3532, %v3533
    %v3535 = vsel %vm2773, %v1740, 0.0
    %v3536 = vadd.f32 %v3534, %v3535
    %v3537 = vsel %vm2773, %v1744, 0.0
    %v3538 = vadd.f32 %v3536, %v3537
    %v3539 = vsel %vm2773, %v1748, 0.0
    %v3540 = vadd.f32 %v3538, %v3539
    %v3541 = vsel %vm2773, %v1752, 0.0
    %v3542 = vadd.f32 %v3540, %v3541
    %v3543 = vsel %vm2773, %v1756, 0.0
    %v3544 = vadd.f32 %v3542, %v3543
    %v3545 = vsel %vm2773, %v1760, 0.0
    %v3546 = vadd.f32 %v3544, %v3545
    %v3547 = vsel %vm2773, %v1764, 0.0
    %v3548 = vadd.f32 %v3546, %v3547
    %v3549 = vsel %vm2773, %v1768, 0.0
    %v3550 = vadd.f32 %v3548, %v3549
    %v3551 = vsel %vm2773, %v1772, 0.0
    %v3552 = vadd.f32 %v3550, %v3551
    %v3553 = vsel %vm2773, %v1776, 0.0
    %v3554 = vadd.f32 %v3552, %v3553
    %v3555 = vsel %vm2773, %v1780, 0.0
    %v3556 = vadd.f32 %v3554, %v3555
    %v3557 = vsel %vm2773, %v1784, 0.0
    %v3558 = vadd.f32 %v3556, %v3557
    %v3559 = vsel %vm2773, %v1788, 0.0
    %v3560 = vadd.f32 %v3558, %v3559
    %v3561 = vsel %vm2773, %v1792, 0.0
    %v3562 = vadd.f32 %v3560, %v3561
    %v3563 = vsel %vm2773, %v1796, 0.0
    %v3564 = vadd.f32 %v3562, %v3563
    %v3565 = vsel %vm2773, %v1800, 0.0
    %v3566 = vadd.f32 %v3564, %v3565
    %v3567 = vsel %vm2773, %v1804, 0.0
    %v3568 = vadd.f32 %v3566, %v3567
    %v3569 = vsel %vm2773, %v1808, 0.0
    %v3570 = vadd.f32 %v3568, %v3569
    %v3571 = vsel %vm2773, %v1812, 0.0
    %v3572 = vadd.f32 %v3570, %v3571
    %v3573 = vsel %vm2773, %v1816, 0.0
    %v3574 = vadd.f32 %v3572, %v3573
    %v3575 = vsel %vm2773, %v1820, 0.0
    %v3576 = vadd.f32 %v3574, %v3575
    %v3577 = vsel %vm2773, %v1824, 0.0
    %v3578 = vadd.f32 %v3576, %v3577
    %v3579 = vsel %vm2773, %v1828, 0.0
    %v3580 = vadd.f32 %v3578, %v3579
    %v3581 = vsel %vm2773, %v1832, 0.0
    %v3582 = vadd.f32 %v3580, %v3581
    %v3583 = vsel %vm2773, %v1836, 0.0
    %v3584 = vadd.f32 %v3582, %v3583
    %v3585 = vsel %vm2773, %v1840, 0.0
    %v3586 = vadd.f32 %v3584, %v3585
    %v3587 = vsel %vm2773, %v1844, 0.0
    %v3588 = vadd.f32 %v3586, %v3587
    %v3589 = vsel %vm2773, %v1848, 0.0
    %v3590 = vadd.f32 %v3588, %v3589
    %v3591 = vsel %vm2773, %v1852, 0.0
    %v3592 = vadd.f32 %v3590, %v3591
    %v3593 = vsel %vm2773, %v1856, 0.0
    %v3594 = vadd.f32 %v3592, %v3593
    %v3595 = vsel %vm2773, %v1860, 0.0
    %v3596 = vadd.f32 %v3594, %v3595
    %v3597 = vsel %vm2773, %v1864, 0.0
    %v3598 = vadd.f32 %v3596, %v3597
    %v3599 = vsel %vm2773, %v1868, 0.0
    %v3600 = vadd.f32 %v3598, %v3599
    %v3601 = vsel %vm2773, %v1872, 0.0
    %v3602 = vadd.f32 %v3600, %v3601
    %v3603 = vsel %vm2773, %v1876, 0.0
    %v3604 = vadd.f32 %v3602, %v3603
    %v3605 = vsel %vm2773, %v1880, 0.0
    %v3606 = vadd.f32 %v3604, %v3605
    %v3607 = vsel %vm2773, %v1884, 0.0
    %v3608 = vadd.f32 %v3606, %v3607
    %v3609 = vsel %vm2773, %v1888, 0.0
    %v3610 = vadd.f32 %v3608, %v3609
    %v3611 = vsel %vm2773, %v1892, 0.0
    %v3612 = vadd.f32 %v3610, %v3611
    %v3613 = vsel %vm2773, %v1896, 0.0
    %v3614 = vadd.f32 %v3612, %v3613
    %v3615 = vsel %vm2773, %v1900, 0.0
    %v3616 = vadd.f32 %v3614, %v3615
    %v3617 = vsel %vm2773, %v1904, 0.0
    %v3618 = vadd.f32 %v3616, %v3617
    %v3619 = vsel %vm2773, %v1908, 0.0
    %v3620 = vadd.f32 %v3618, %v3619
    %v3621 = vsel %vm2773, %v1912, 0.0
    %v3622 = vadd.f32 %v3620, %v3621
    %v3623 = vsel %vm2773, %v1916, 0.0
    %v3624 = vadd.f32 %v3622, %v3623
    %v3625 = vsel %vm2773, %v1920, 0.0
    %v3626 = vadd.f32 %v3624, %v3625
    %v3627 = vsel %vm2773, %v1924, 0.0
    %v3628 = vadd.f32 %v3626, %v3627
    %v3629 = vsel %vm2773, %v1928, 0.0
    %v3630 = vadd.f32 %v3628, %v3629
    %v3631 = vsel %vm2773, %v1932, 0.0
    %v3632 = vadd.f32 %v3630, %v3631
    %v3633 = vsel %vm2773, %v1936, 0.0
    %v3634 = vadd.f32 %v3632, %v3633
    %v3635 = vsel %vm2773, %v1940, 0.0
    %v3636 = vadd.f32 %v3634, %v3635
    %v3637 = vsel %vm2773, %v1944, 0.0
    %v3638 = vadd.f32 %v3636, %v3637
    %v3639 = vsel %vm2773, %v1948, 0.0
    %v3640 = vadd.f32 %v3638, %v3639
    %v3641 = vsel %vm2773, %v1952, 0.0
    %v3642 = vadd.f32 %v3640, %v3641
    %v3643 = vsel %vm2773, %v1956, 0.0
    %v3644 = vadd.f32 %v3642, %v3643
    %v3645 = vsel %vm2773, %v1960, 0.0
    %v3646 = vadd.f32 %v3644, %v3645
    %v3647 = vsel %vm2773, %v1964, 0.0
    %v3648 = vadd.f32 %v3646, %v3647
    %v3649 = vsel %vm2773, %v1968, 0.0
    %v3650 = vadd.f32 %v3648, %v3649
    %v3651 = vsel %vm2773, %v1972, 0.0
    %v3652 = vadd.f32 %v3650, %v3651
    %v3653 = vsel %vm2773, %v1976, 0.0
    %v3654 = vadd.f32 %v3652, %v3653
    %v3655 = vsel %vm2773, %v1980, 0.0
    %v3656 = vadd.f32 %v3654, %v3655
    %v3657 = vsel %vm2773, %v1984, 0.0
    %v3658 = vadd.f32 %v3656, %v3657
    %v3659 = vsel %vm2773, %v1988, 0.0
    %v3660 = vadd.f32 %v3658, %v3659
    %v3661 = vsel %vm2773, %v1992, 0.0
    %v3662 = vadd.f32 %v3660, %v3661
    %v3663 = vsel %vm2773, %v1996, 0.0
    %v3664 = vadd.f32 %v3662, %v3663
    %v3665 = vsel %vm2773, %v2000, 0.0
    %v3666 = vadd.f32 %v3664, %v3665
    %v3667 = vsel %vm2773, %v2004, 0.0
    %v3668 = vadd.f32 %v3666, %v3667
    %v3669 = vsel %vm2773, %v2008, 0.0
    %v3670 = vadd.f32 %v3668, %v3669
    %v3671 = vsel %vm2773, %v2012, 0.0
    %v3672 = vadd.f32 %v3670, %v3671
    %v3673 = vsel %vm2773, %v2016, 0.0
    %v3674 = vadd.f32 %v3672, %v3673
    %v3675 = vsel %vm2773, %v2020, 0.0
    %v3676 = vadd.f32 %v3674, %v3675
    %v3677 = vsel %vm2773, %v2024, 0.0
    %v3678 = vadd.f32 %v3676, %v3677
    %v3679 = vsel %vm2773, %v2028, 0.0
    %v3680 = vadd.f32 %v3678, %v3679
    %v3681 = vsel %vm2773, %v2032, 0.0
    %v3682 = vadd.f32 %v3680, %v3681
    %v3683 = vsel %vm2773, %v2036, 0.0
    %v3684 = vadd.f32 %v3682, %v3683
    %v3685 = vsel %vm2773, %v2040, 0.0
    %v3686 = vadd.f32 %v3684, %v3685
    %v3687 = vsel %vm2773, %v2044, 0.0
    %v3688 = vadd.f32 %v3686, %v3687
    %v3689 = vsel %vm2773, %v2048, 0.0
    %v3690 = vadd.f32 %v3688, %v3689
    %v3691 = vsel %vm2773, %v2052, 0.0
    %v3692 = vadd.f32 %v3690, %v3691
    %v3693 = vsel %vm2773, %v2056, 0.0
    %v3694 = vadd.f32 %v3692, %v3693
    %v3695 = vsel %vm2773, %v2060, 0.0
    %v3696 = vadd.f32 %v3694, %v3695
    %v3697 = vsel %vm2773, %v2064, 0.0
    %v3698 = vadd.f32 %v3696, %v3697
    %v3699 = vsel %vm2773, %v2068, 0.0
    %v3700 = vadd.f32 %v3698, %v3699
    %v3701 = vsel %vm2773, %v2072, 0.0
    %v3702 = vadd.f32 %v3700, %v3701
    %v3703 = vsel %vm2773, %v2076, 0.0
    %v3704 = vadd.f32 %v3702, %v3703
    %v3705 = vsel %vm2773, %v2080, 0.0
    %v3706 = vadd.f32 %v3704, %v3705
    %v3707 = vsel %vm2773, %v2084, 0.0
    %v3708 = vadd.f32 %v3706, %v3707
    %v3709 = vsel %vm2773, %v2088, 0.0
    %v3710 = vadd.f32 %v3708, %v3709
    %v3711 = vsel %vm2773, %v2092, 0.0
    %v3712 = vadd.f32 %v3710, %v3711
    %v3713 = vsel %vm2773, %v2096, 0.0
    %v3714 = vadd.f32 %v3712, %v3713
    %v3715 = vsel %vm2773, %v2100, 0.0
    %v3716 = vadd.f32 %v3714, %v3715
    %v3717 = vsel %vm2773, %v2104, 0.0
    %v3718 = vadd.f32 %v3716, %v3717
    %v3719 = vsel %vm2773, %v2108, 0.0
    %v3720 = vadd.f32 %v3718, %v3719
    %v3721 = vsel %vm2773, %v2112, 0.0
    %v3722 = vadd.f32 %v3720, %v3721
    %v3723 = vsel %vm2773, %v2116, 0.0
    %v3724 = vadd.f32 %v3722, %v3723
    %v3725 = vsel %vm2773, %v2120, 0.0
    %v3726 = vadd.f32 %v3724, %v3725
    %v3727 = vsel %vm2773, %v2124, 0.0
    %v3728 = vadd.f32 %v3726, %v3727
    %v3729 = vsel %vm2773, %v2128, 0.0
    %v3730 = vadd.f32 %v3728, %v3729
    %v3731 = vsel %vm2773, %v2132, 0.0
    %v3732 = vadd.f32 %v3730, %v3731
    %v3733 = vsel %vm2773, %v2136, 0.0
    %v3734 = vadd.f32 %v3732, %v3733
    %v3735 = vsel %vm2773, %v2140, 0.0
    %v3736 = vadd.f32 %v3734, %v3735
    %v3737 = vsel %vm2773, %v2144, 0.0
    %v3738 = vadd.f32 %v3736, %v3737
    %v3739 = vsel %vm2773, %v2148, 0.0
    %v3740 = vadd.f32 %v3738, %v3739
    %v3741 = vsel %vm2773, %v2152, 0.0
    %v3742 = vadd.f32 %v3740, %v3741
    %v3743 = vsel %vm2773, %v2156, 0.0
    %v3744 = vadd.f32 %v3742, %v3743
    %v3745 = vsel %vm2773, %v2160, 0.0
    %v3746 = vadd.f32 %v3744, %v3745
    %v3747 = vsel %vm2773, %v2164, 0.0
    %v3748 = vadd.f32 %v3746, %v3747
    %v3749 = vsel %vm2773, %v2168, 0.0
    %v3750 = vadd.f32 %v3748, %v3749
    %v3751 = vsel %vm2773, %v2172, 0.0
    %v3752 = vadd.f32 %v3750, %v3751
    %v3753 = vsel %vm2773, %v2176, 0.0
    %v3754 = vadd.f32 %v3752, %v3753
    %v3755 = vsel %vm2773, %v2180, 0.0
    %v3756 = vadd.f32 %v3754, %v3755
    %v3757 = vsel %vm2773, %v2184, 0.0
    %v3758 = vadd.f32 %v3756, %v3757
    %v3759 = vsel %vm2773, %v2188, 0.0
    %v3760 = vadd.f32 %v3758, %v3759
    %v3761 = vsel %vm2773, %v2192, 0.0
    %v3762 = vadd.f32 %v3760, %v3761
    %v3763 = vsel %vm2773, %v2196, 0.0
    %v3764 = vadd.f32 %v3762, %v3763
    %v3765 = vsel %vm2773, %v2200, 0.0
    %v3766 = vadd.f32 %v3764, %v3765
    %v3767 = vsel %vm2773, %v2204, 0.0
    %v3768 = vadd.f32 %v3766, %v3767
    %v3769 = vsel %vm2773, %v2208, 0.0
    %v3770 = vadd.f32 %v3768, %v3769
    %v3771 = vsel %vm2773, %v2212, 0.0
    %v3772 = vadd.f32 %v3770, %v3771
    %v3773 = vsel %vm2773, %v2216, 0.0
    %v3774 = vadd.f32 %v3772, %v3773
    %v3775 = vsel %vm2773, %v2220, 0.0
    %v3776 = vadd.f32 %v3774, %v3775
    %v3777 = vsel %vm2773, %v2224, 0.0
    %v3778 = vadd.f32 %v3776, %v3777
    %v3779 = vsel %vm2773, %v2228, 0.0
    %v3780 = vadd.f32 %v3778, %v3779
    %v3781 = vsel %vm2773, %v2232, 0.0
    %v3782 = vadd.f32 %v3780, %v3781
    %v3783 = vsel %vm2773, %v2236, 0.0
    %v3784 = vadd.f32 %v3782, %v3783
    %v3785 = vsel %vm2773, %v2240, 0.0
    %v3786 = vadd.f32 %v3784, %v3785
    %v3787 = vsel %vm2773, %v2244, 0.0
    %v3788 = vadd.f32 %v3786, %v3787
    %v3789 = vsel %vm2773, %v2248, 0.0
    %v3790 = vadd.f32 %v3788, %v3789
    %v3791 = vsel %vm2773, %v2252, 0.0
    %v3792 = vadd.f32 %v3790, %v3791
    %v3793 = vsel %vm2773, %v2256, 0.0
    %v3794 = vadd.f32 %v3792, %v3793
    %v3795 = vsel %vm2773, %v2260, 0.0
    %v3796 = vadd.f32 %v3794, %v3795
    %3797 = vadd.xlane.f32.xlu0 %v3796
    %v3798 = vpop.xlane.xlu0 %3797
    %v3799 = vrot.slane %v3798, 4
    %v3800 = vadd.f32 %v3798, %v3799
    %v3801 = vrot.slane %v3800, 2
    %v3802 = vadd.f32 %v3800, %v3801
    %v3803 = vrot.slane %v3802, 1
    %v3804 = vadd.f32 %v3802, %v3803
    %s3805 = vtos %v3804
    %s3806 = scalar_lea.smem [#allocation5], 0
    %3807 = sst [smem:[%s3806]] %s3805
    // Predicated region
    $region10: #{tpu_custom_call.1} parent=1 // pred_check
      _
    $region11: #{tpu_custom_call.1} parent=1 // pred_check_branch
      %3809 = sbr.rel (0) target = $region13
    $region12: #{tpu_custom_call.1} parent=1 // pred_region
      %s3811 = ssub.s32 16, 16
      %3812 = vsyncadd [#allocation4], %s3811
      %3815 = dma.smem_to_hbm [#allocation5], 16, %s1, [#allocation4]
    $region13: #{tpu_custom_call.1} parent=1 // pred_fallthru
      _
    // Predicated region
    $region14: #{tpu_custom_call.1} parent=1 // pred_check
      _
    $region15: #{tpu_custom_call.1} parent=1 // pred_check_branch
      %3817 = sbr.rel (0) target = $region17
    $region16: #{tpu_custom_call.1} parent=1 // pred_region
      %3818 = dma.done [#allocation4], 16
    $region17: #{tpu_custom_call.1} parent=1 // pred_fallthru
      _
    %3819 = sfence
    %3820 = vsyncpa [#allocation3], 1
    %3821 = vsyncpa [#allocation4], 1

</llo_original>
